<compile_context>
chip_gen: v7x
topology: tpu7x:2x2x1
jax: 0.10.0
libtpu: 0.0.40
codegen_flags: <defaults>
</compile_context>

<pallas_src>
import jax
import jax.numpy as jnp
from jax import lax
from jax.experimental import pallas as pl
from jax.experimental.pallas import tpu as pltpu


def _pattn_kernel(fi_ref, fq_ref, cnt_ref, nn_ref, wk_ref, wq_ref, we_ref, out_ref):
    TB, L, D = fi_ref.shape
    f32 = jnp.float32

    fi3 = fi_ref[...]                                   # [TB, L, D] node features
    fi2 = fi3.reshape(TB * L, D)                        # [TB*L, D]

    # key = fc_key(feat_i) for all TB*L nodes in one MXU push
    key = jnp.dot(fi2, wk_ref[...], preferred_element_type=f32)          # [TB*L, D]

    # qry = fc_user(feat_u) + b_user + fc_last(feat_i[last])  -- single fused matmul
    qry = jnp.dot(fq_ref[...], wq_ref[...], preferred_element_type=f32)  # [TB, D]

    # e = fc_e(sigmoid(qry + key)) + log(cnt);  fc_e as VPU mul + lane reduce
    sig = jax.nn.sigmoid(qry[:, None, :] + key.reshape(TB, L, D))        # [TB, L, D]
    e = jnp.sum(sig * we_ref[...][None, :, :], axis=-1)                  # [TB, L]
    e = e + jnp.log(cnt_ref[...])                                        # [TB, L]

    # per-graph masked softmax over the L node slots (mask built in-kernel)
    nvalid = nn_ref[...]                                                  # [TB, 1] int32
    node_id = lax.broadcasted_iota(jnp.int32, (TB, L), 1)
    valid = node_id < nvalid                                              # [TB, L] bool
    e_m = jnp.where(valid, e, jnp.float32(-1e30))
    m = jnp.max(e_m, axis=-1, keepdims=True)                              # [TB, 1]
    p = jnp.where(valid, jnp.exp(e_m - m), jnp.float32(0.0))              # [TB, L]
    denom = jnp.sum(p, axis=-1, keepdims=True)                            # [TB, 1]
    # approx=False keeps the 1e-5 tolerance; flip to approx=True (EUP vrcp)
    # if ~1e-3 relative error on alpha is acceptable.
    alpha = p * pl.reciprocal(denom, approx=False)                        # [TB, L]

    # rst = segment_sum(alpha * feat_i)   (VPU mul + sublane reduce)
    rst = jnp.sum(alpha[:, :, None] * fi3, axis=1)                        # [TB, D]
    out_ref[...] = rst.astype(out_ref.dtype)


def pattention_readout(feat_i_pad, feat_u, last_idx, cnt_pad, num_nodes, params, *, tb=16):
    """feat_i_pad: [B, L, D], feat_u: [B, D], last_idx: [B] (node index within
    each graph), cnt_pad: [B, L] (pad entries >= 1), num_nodes: [B] (>= 1)."""
    B, L, D = feat_i_pad.shape
    f32 = jnp.float32

    # Gather the last-node feature of each graph (tiny: B*D elements) and fuse
    # the whole query path into one operand / one weight:
    #   qry = [feat_u | feat_last | 1] @ [W_user^T ; W_last^T ; b_user]
    feat_last = jnp.take_along_axis(
        feat_i_pad, last_idx[:, None, None].astype(jnp.int32), axis=1)[:, 0, :]   # [B, D]
    fq = jnp.concatenate(
        [feat_u.astype(f32), feat_last.astype(f32), jnp.ones((B, 1), f32)],
        axis=-1)                                                                   # [B, 2D+1]

    wq = jnp.concatenate(
        [params["w_user"].T, params["w_last"].T, params["b_user"][None, :]],
        axis=0).astype(f32)                                                        # [2D+1, D]
    wk = params["w_key"].T.astype(f32)                                             # [D, D]
    we = params["w_e"].astype(f32)                                                 # [1, D] row

    # Pad the batch up to a multiple of tb graphs per block.
    tb = min(tb, ((B + 7) // 8) * 8)
    Bp = ((B + tb - 1) // tb) * tb
    pad = Bp - B
    fi = jnp.pad(feat_i_pad.astype(f32), ((0, pad), (0, 0), (0, 0)))
    fqp = jnp.pad(fq, ((0, pad), (0, 0)))
    cntp = jnp.pad(cnt_pad.astype(f32), ((0, pad), (0, 0)), constant_values=1.0)
    nn = jnp.pad(num_nodes.astype(jnp.int32), ((0, pad),), constant_values=1)[:, None]  # [Bp,1]

    fixed = lambda b: (0, 0)
    out = pl.pallas_call(
        _pattn_kernel,
        out_shape=jax.ShapeDtypeStruct((Bp, D), f32),
        grid=(Bp // tb,),
        in_specs=[
            pl.BlockSpec((tb, L, D), lambda b: (b, 0, 0)),     # feat_i block
            pl.BlockSpec((tb, 2 * D + 1), lambda b: (b, 0)),   # fused query operand
            pl.BlockSpec((tb, L), lambda b: (b, 0)),           # cnt (lane-dense)
            pl.BlockSpec((tb, 1), lambda b: (b, 0)),           # num_nodes
            pl.BlockSpec((D, D), fixed),                       # W_key^T (resident)
            pl.BlockSpec((2 * D + 1, D), fixed),               # fused [Wu^T; Wl^T; b]
            pl.BlockSpec((1, D), fixed),                       # W_e row
        ],
        out_specs=pl.BlockSpec((tb, D), lambda b: (b, 0)),     # dense [tb, D] slab
        compiler_params=pltpu.CompilerParams(
            dimension_semantics=("parallel",)),
    )(fi, fqp, cntp, nn, wk, wq, we)
    return out[:B]


def reference(feat_i_pad, feat_u, last_idx, cnt_pad, num_nodes, params):
    """Pure-JAX reference mirroring the PyTorch/DGL forward on the padded layout."""
    B, L, D = feat_i_pad.shape
    mask = jnp.arange(L)[None, :] < num_nodes[:, None]
    key = feat_i_pad @ params["w_key"].T
    fl = jnp.take_along_axis(feat_i_pad, last_idx[:, None, None], axis=1)[:, 0, :]
    qry = feat_u @ params["w_user"].T + params["b_user"] + fl @ params["w_last"].T
    e = jax.nn.sigmoid(qry[:, None, :] + key) @ params["w_e"].T               # [B, L, 1]
    e = e[..., 0] + jnp.log(cnt_pad)
    e = jnp.where(mask, e, -jnp.inf)
    alpha = jax.nn.softmax(e, axis=1)
    alpha = jnp.where(mask, alpha, 0.0)
    return jnp.sum(alpha[..., None] * feat_i_pad, axis=1)


if __name__ == "__main__":
    B, L, D = 32, 8, 32
    key0 = jax.random.PRNGKey(0)
    k = jax.random.split(key0, 8)

    num_nodes = jax.random.randint(k[0], (B,), 1, L + 1).astype(jnp.int32)   # 1..L valid nodes
    last_idx = num_nodes - 1                                                 # last node of each graph
    node_mask = jnp.arange(L)[None, :] < num_nodes[:, None]

    feat_i = jax.random.normal(k[1], (B, L, D), jnp.float32) * node_mask[:, :, None]
    feat_u = jax.random.normal(k[2], (B, D), jnp.float32)
    cnt = jnp.where(node_mask,
                    jax.random.randint(k[3], (B, L), 1, 6), 1).astype(jnp.float32)

    params = {
        "w_key":  0.1 * jax.random.normal(k[4], (D, D), jnp.float32),
        "w_user": 0.1 * jax.random.normal(k[5], (D, D), jnp.float32),
        "b_user": 0.1 * jax.random.normal(k[6], (D,), jnp.float32),
        "w_last": 0.1 * jax.random.normal(k[7], (D, D), jnp.float32),
        "w_e":    0.1 * jax.random.normal(k[0], (1, D), jnp.float32),
    }

    out = pattention_readout(feat_i, feat_u, last_idx, cnt, num_nodes, params)
    out = jax.block_until_ready(out)

    ref = reference(feat_i, feat_u, last_idx, cnt, num_nodes, params)
    assert out.shape == (B, D)
    assert jnp.allclose(out, ref, rtol=1e-5, atol=1e-5), "mismatch vs reference"

    # TODO(synk): batch_norm / feat_drop / activation branches of the module are
    # disabled by default in the spec (batch_norm=False, feat_drop=0, activation=None)
    # and are not implemented in the kernel.
    print("KERNEL_OK")
</pallas_src>

<mosaic_0001>
module attributes {stable_mosaic.version = 11 : i64} {
  func.func @_pattn_kernel(%arg0: i32, %arg1: memref<16x8x32xf32, #tpu.memory_space<vmem>>, %arg2: memref<16x65xf32, #tpu.memory_space<vmem>>, %arg3: memref<16x8xf32, #tpu.memory_space<vmem>>, %arg4: memref<16x1xi32, #tpu.memory_space<vmem>>, %arg5: memref<32x32xf32, #tpu.memory_space<vmem>>, %arg6: memref<65x32xf32, #tpu.memory_space<vmem>>, %arg7: memref<1x32xf32, #tpu.memory_space<vmem>>, %arg8: memref<16x32xf32, #tpu.memory_space<vmem>>) attributes {dimension_semantics = [#tpu.dimension_semantics<parallel>], iteration_bounds = array<i64: 2>, scalar_prefetch = 0 : i64, scratch_operands = 0 : i64, tpu.core_type = #tpu.core_type<tc>, window_params = [{transform_indices = @transform_0, window_bounds = array<i64: 16, 8, 32>}, {transform_indices = @transform_1, window_bounds = array<i64: 16, 65>}, {transform_indices = @transform_2, window_bounds = array<i64: 16, 8>}, {transform_indices = @transform_3, window_bounds = array<i64: 16, 1>}, {pipeline_mode = #tpu.pipeline_mode<synchronous>, transform_indices = @transform_4, window_bounds = array<i64: 32, 32>}, {pipeline_mode = #tpu.pipeline_mode<synchronous>, transform_indices = @transform_5, window_bounds = array<i64: 65, 32>}, {pipeline_mode = #tpu.pipeline_mode<synchronous>, transform_indices = @transform_6, window_bounds = array<i64: 1, 32>}, {transform_indices = @transform_7, window_bounds = array<i64: 16, 32>}]} {
    %c0 = arith.constant 0 : index
    %c0_0 = arith.constant 0 : index
    %c0_1 = arith.constant 0 : index
    %0 = vector.load %arg1[%c0, %c0_0, %c0_1] : memref<16x8x32xf32, #tpu.memory_space<vmem>>, vector<16x8x32xf32>
    %1 = vector.shape_cast %0 : vector<16x8x32xf32> to vector<128x32xf32>
    %c0_2 = arith.constant 0 : index
    %c0_3 = arith.constant 0 : index
    %2 = vector.load %arg5[%c0_2, %c0_3] : memref<32x32xf32, #tpu.memory_space<vmem>>, vector<32x32xf32>
    %cst = arith.constant dense<0.000000e+00> : vector<128x32xf32>
    %3 = tpu.matmul %1, %2, %cst {dimension_numbers = #tpu.dot_dimension_numbers<[1], [0], [0], [1], [0, 0, 1, 1], [], []>} : vector<128x32xf32>, vector<32x32xf32>, vector<128x32xf32> -> vector<128x32xf32>
    %c0_4 = arith.constant 0 : index
    %c0_5 = arith.constant 0 : index
    %4 = vector.load %arg2[%c0_4, %c0_5] : memref<16x65xf32, #tpu.memory_space<vmem>>, vector<16x65xf32>
    %c0_6 = arith.constant 0 : index
    %c0_7 = arith.constant 0 : index
    %5 = vector.load %arg6[%c0_6, %c0_7] : memref<65x32xf32, #tpu.memory_space<vmem>>, vector<65x32xf32>
    %cst_8 = arith.constant dense<0.000000e+00> : vector<16x32xf32>
    %6 = tpu.matmul %4, %5, %cst_8 {dimension_numbers = #tpu.dot_dimension_numbers<[1], [0], [0], [1], [0, 0, 1, 1], [], []>} : vector<16x65xf32>, vector<65x32xf32>, vector<16x32xf32> -> vector<16x32xf32>
    %7 = vector.shape_cast %6 : vector<16x32xf32> to vector<16x1x32xf32>
    %8 = vector.shape_cast %3 : vector<128x32xf32> to vector<16x8x32xf32>
    %9 = vector.broadcast %7 : vector<16x1x32xf32> to vector<16x8x32xf32>
    %10 = arith.addf %9, %8 : vector<16x8x32xf32>
    %11 = arith.negf %10 : vector<16x8x32xf32>
    %12 = math.exp %11 : vector<16x8x32xf32>
    %cst_9 = arith.constant 1.000000e+00 : f32
    %13 = vector.broadcast %cst_9 : f32 to vector<16x8x32xf32>
    %14 = arith.addf %13, %12 : vector<16x8x32xf32>
    %15 = arith.divf %13, %14 : vector<16x8x32xf32>
    %c0_10 = arith.constant 0 : index
    %c0_11 = arith.constant 0 : index
    %16 = vector.load %arg7[%c0_10, %c0_11] : memref<1x32xf32, #tpu.memory_space<vmem>>, vector<1x32xf32>
    %17 = vector.shape_cast %16 : vector<1x32xf32> to vector<1x1x32xf32>
    %18 = vector.broadcast %17 : vector<1x1x32xf32> to vector<16x8x32xf32>
    %19 = arith.mulf %15, %18 : vector<16x8x32xf32>
    %cst_12 = arith.constant dense<0.000000e+00> : vector<16x8xf32>
    %20 = vector.multi_reduction <add>, %19, %cst_12 [2] : vector<16x8x32xf32> to vector<16x8xf32>
    %c0_13 = arith.constant 0 : index
    %c0_14 = arith.constant 0 : index
    %21 = vector.load %arg3[%c0_13, %c0_14] : memref<16x8xf32, #tpu.memory_space<vmem>>, vector<16x8xf32>
    %22 = math.log %21 : vector<16x8xf32>
    %23 = arith.addf %20, %22 : vector<16x8xf32>
    %c0_15 = arith.constant 0 : index
    %c0_16 = arith.constant 0 : index
    %24 = vector.load %arg4[%c0_15, %c0_16] : memref<16x1xi32, #tpu.memory_space<vmem>>, vector<16x1xi32>
    %25 = tpu.iota {dimensions = array<i32: 1>} : vector<16x8xi32>
    %26 = vector.broadcast %24 : vector<16x1xi32> to vector<16x8xi32>
    %27 = arith.cmpi slt, %25, %26 : vector<16x8xi32>
    %cst_17 = arith.constant -1.000000e+30 : f32
    %28 = vector.broadcast %cst_17 : f32 to vector<16x8xf32>
    %29 = arith.select %27, %23, %28 : vector<16x8xi1>, vector<16x8xf32>
    %cst_18 = arith.constant dense<0xFF800000> : vector<16xf32>
    %30 = vector.multi_reduction <maximumf>, %29, %cst_18 [1] : vector<16x8xf32> to vector<16xf32>
    %31 = vector.shape_cast %30 : vector<16xf32> to vector<16x1xf32>
    %32 = vector.broadcast %31 : vector<16x1xf32> to vector<16x8xf32>
    %33 = arith.subf %29, %32 : vector<16x8xf32>
    %34 = math.exp %33 : vector<16x8xf32>
    %cst_19 = arith.constant 0.000000e+00 : f32
    %35 = vector.broadcast %cst_19 : f32 to vector<16x8xf32>
    %36 = arith.select %27, %34, %35 : vector<16x8xi1>, vector<16x8xf32>
    %cst_20 = arith.constant dense<0.000000e+00> : vector<16xf32>
    %37 = vector.multi_reduction <add>, %36, %cst_20 [1] : vector<16x8xf32> to vector<16xf32>
    %38 = vector.shape_cast %37 : vector<16xf32> to vector<16x1xf32>
    %39 = tpu.reciprocal %38 : vector<16x1xf32> -> vector<16x1xf32>
    %40 = vector.broadcast %39 : vector<16x1xf32> to vector<16x8xf32>
    %41 = arith.mulf %36, %40 : vector<16x8xf32>
    %42 = vector.shape_cast %41 : vector<16x8xf32> to vector<16x8x1xf32>
    %43 = vector.broadcast %42 : vector<16x8x1xf32> to vector<16x8x32xf32>
    %44 = arith.mulf %43, %0 : vector<16x8x32xf32>
    %cst_21 = arith.constant dense<0.000000e+00> : vector<16x32xf32>
    %45 = vector.multi_reduction <add>, %44, %cst_21 [1] : vector<16x8x32xf32> to vector<16x32xf32>
    %c0_22 = arith.constant 0 : index
    %c0_23 = arith.constant 0 : index
    %46 = vector.load %arg8[%c0_22, %c0_23] : memref<16x32xf32, #tpu.memory_space<vmem>>, vector<16x32xf32>
    tpu.vector_store %arg8[%c0_22, %c0_23], %45 {strides = array<i32>} : memref<16x32xf32, #tpu.memory_space<vmem>>, vector<16x32xf32>,
    return
  }
  func.func @transform_0(%arg0: i32) -> (i32, i32, i32) {
    %c0_i32 = arith.constant 0 : i32
    %c0_i32_0 = arith.constant 0 : i32
    %c0_i32_1 = arith.constant 0 : i32
    return %arg0, %c0_i32, %c0_i32_0 : i32, i32, i32
  }
  func.func @transform_1(%arg0: i32) -> (i32, i32) {
    %c0_i32 = arith.constant 0 : i32
    %c0_i32_0 = arith.constant 0 : i32
    return %arg0, %c0_i32 : i32, i32
  }
  func.func @transform_2(%arg0: i32) -> (i32, i32) {
    %c0_i32 = arith.constant 0 : i32
    %c0_i32_0 = arith.constant 0 : i32
    return %arg0, %c0_i32 : i32, i32
  }
  func.func @transform_3(%arg0: i32) -> (i32, i32) {
    %c0_i32 = arith.constant 0 : i32
    %c0_i32_0 = arith.constant 0 : i32
    return %arg0, %c0_i32 : i32, i32
  }
  func.func @transform_4(%arg0: i32) -> (i32, i32) {
    %c0_i32 = arith.constant 0 : i32
    %c0_i32_0 = arith.constant 0 : i32
    %c0_i32_1 = arith.constant 0 : i32
    return %c0_i32, %c0_i32_0 : i32, i32
  }
  func.func @transform_5(%arg0: i32) -> (i32, i32) {
    %c0_i32 = arith.constant 0 : i32
    %c0_i32_0 = arith.constant 0 : i32
    %c0_i32_1 = arith.constant 0 : i32
    return %c0_i32, %c0_i32_0 : i32, i32
  }
  func.func @transform_6(%arg0: i32) -> (i32, i32) {
    %c0_i32 = arith.constant 0 : i32
    %c0_i32_0 = arith.constant 0 : i32
    %c0_i32_1 = arith.constant 0 : i32
    return %c0_i32, %c0_i32_0 : i32, i32
  }
  func.func @transform_7(%arg0: i32) -> (i32, i32) {
    %c0_i32 = arith.constant 0 : i32
    %c0_i32_0 = arith.constant 0 : i32
    return %arg0, %c0_i32 : i32, i32
  }
}

</mosaic_0001>

<llo_original>
// kernel: tpu_custom_call.1
$region0: #{tpu_custom_call.1}
  #allocation0 [shape = 'u32[]', space=smem, size = 0x4, offset = 0x4, fixed_abs, tag = 'smem constant byte address 0x4 - core index']
  #allocation1 [shape = 'u32[144,128]{1,0:T(1,128)}', space=vmem, size = 0x12000, scoped, tag = 'internal scratch']
  %s0 = inlined_call_operand.hbm [shape: f32[32,8,32], index: 0, kind: input, shape index: {}]
  %s1 = inlined_call_operand.vmem [shape: f32[32,65], index: 1, kind: input, shape index: {}]
  %s2 = inlined_call_operand.vmem [shape: f32[32,8], index: 2, kind: input, shape index: {}]
  %s3 = inlined_call_operand.vmem [shape: s32[32,1], index: 3, kind: input, shape index: {}]
  %s4 = inlined_call_operand.vmem [shape: f32[32,32], index: 4, kind: input, shape index: {}]
  %s5 = inlined_call_operand.vmem [shape: f32[65,32], index: 5, kind: input, shape index: {}]
  %s6 = inlined_call_operand.vmem [shape: f32[1,32], index: 6, kind: input, shape index: {}]
  %s7 = inlined_call_operand.hbm [shape: f32[32,32], index: 7, kind: output, shape index: {}]
  %s8 = sld [smem:[#allocation0]]
  $region65: #{tpu_custom_call.1} parent=0
    _
  %s10 = ssub.s32 1, %s8
  %s11 = scalar_select 0, %s10, %s8
  $region1: #{tpu_custom_call.1} parent=0
    #allocation2 [shape = 'u8[131072]{0}', space=vmem, size = 0x20000, scoped, tag = 'input window, operand 0']
    #allocation3 [shape = 's32[2]{0}', space=sflag, size = 0x8, scoped, tag = 'scoped memory for tpu_custom_call.1']
    #allocation4 [shape = 's32[2]{0}', space=sflag, size = 0x8, scoped, tag = 'scoped memory for tpu_custom_call.1']
    #allocation5 [shape = 'u8[16384]{0}', space=vmem, size = 0x4000, scoped, tag = 'output window, operand 0']
    %12 = vsyncpa [#allocation3], 0
    %s13 = scalar_lea.sflag [#allocation3], 1
    %14 = vsyncpa %s13, 0
    %15 = vsyncpa [#allocation4], 0
    %s16 = scalar_lea.sflag [#allocation4], 1
    %17 = vsyncpa %s16, 0
    loop: start=0, step=1, limit=4
    $region2: #{tpu_custom_call.1} parent=1 // loop_pre_header
      _
    $region3: #{tpu_custom_call.1} parent=1 // loop_header
      %s19 = sphi 0, %s23
      %p20 = scmp.ge.s32.totalorder %s19, 4
      %s29 = sphi 0, %s31
      %s32 = sphi 0, %s29
      %s33 = sphi 0, %s32
      %s49 = sphi 0, %s33
      %s55 = sphi 0, %s57
      %s58 = sphi 0, %s55
      %s59 = sphi 0, %s58
      %s75 = sphi 0, %s59
      %s81 = sphi 0, %s83
      %s84 = sphi 0, %s81
      %s85 = sphi 0, %s84
      %s101 = sphi 0, %s85
      %s107 = sphi 0, %s109
      %s110 = sphi 0, %s107
      %s111 = sphi 0, %s110
      %s127 = sphi 0, %s111
      %s131 = sphi 0, %s131
      %s133 = sphi 0, %s131
      %s134 = sphi 0, %s133
      %s148 = sphi 0, %s134
      %s152 = sphi 0, %s152
      %s154 = sphi 0, %s152
      %s155 = sphi 0, %s154
      %s169 = sphi 0, %s155
      %s173 = sphi 0, %s173
      %s175 = sphi 0, %s173
      %s176 = sphi 0, %s175
      %s190 = sphi 0, %s176
      %s196 = sphi 0, %s198
      %s199 = sphi 0, %s196
      %s200 = sphi 0, %s199
      %s216 = sphi 0, %s200
    $region4: #{tpu_custom_call.1} parent=1 // loop_header_branch
      %22 = sbr.rel (%p20) target = $region8
    $region5: #{tpu_custom_call.1} parent=1 // loop_body
      %s24 = ssub.s32 %s19, 1
      %s25 = ssub.s32 %s19, 2
      %s26 = sadd.s32 %s19, 1
      %s27 = ssub.s32 %s19, %s26
      %p28 = scmp.eq.s32.totalorder %s27, 0
      %s30 = sadd.s32 %s29, 1
      %s31 = scalar_select %p28, %s29, %s30
      %p34 = pneg %p28
      %p35 = scmp.eq.s32.totalorder %s19, 1
      %p36 = por %p34, %p35
      %p37 = scmp.ne.s32.totalorder %s29, %s32
      %p38 = scmp.eq.s32.totalorder %s19, 0
      %p39 = por %p37, %p38
      %p40 = scmp.ne.s32.totalorder %s29, %s32
      %p41 = scmp.eq.s32.totalorder %s24, 1
      %p42 = por %p40, %p41
      %p43 = scmp.ne.s32.totalorder %s32, %s33
      %p44 = scmp.eq.s32.totalorder %s24, 0
      %p45 = por %p43, %p44
      %p46 = scmp.ne.s32.totalorder %s32, %s33
      %p47 = scmp.eq.s32.totalorder %s25, 1
      %p48 = por %p46, %p47
      %p50 = scmp.ne.s32.totalorder %s33, %s49
      %p51 = scmp.eq.s32.totalorder %s25, 0
      %p52 = por %p50, %p51
      %s53 = ssub.s32 %s19, %s26
      %p54 = scmp.eq.s32.totalorder %s53, 0
      %s56 = sadd.s32 %s55, 1
      %s57 = scalar_select %p54, %s55, %s56
      %p60 = pneg %p54
      %p61 = scmp.eq.s32.totalorder %s19, 1
      %p62 = por %p60, %p61
      %p63 = scmp.ne.s32.totalorder %s55, %s58
      %p64 = scmp.eq.s32.totalorder %s19, 0
      %p65 = por %p63, %p64
      %p66 = scmp.ne.s32.totalorder %s55, %s58
      %p67 = scmp.eq.s32.totalorder %s24, 1
      %p68 = por %p66, %p67
      %p69 = scmp.ne.s32.totalorder %s58, %s59
      %p70 = scmp.eq.s32.totalorder %s24, 0
      %p71 = por %p69, %p70
      %p72 = scmp.ne.s32.totalorder %s58, %s59
      %p73 = scmp.eq.s32.totalorder %s25, 1
      %p74 = por %p72, %p73
      %p76 = scmp.ne.s32.totalorder %s59, %s75
      %p77 = scmp.eq.s32.totalorder %s25, 0
      %p78 = por %p76, %p77
      %s79 = ssub.s32 %s19, %s26
      %p80 = scmp.eq.s32.totalorder %s79, 0
      %s82 = sadd.s32 %s81, 1
      %s83 = scalar_select %p80, %s81, %s82
      %p86 = pneg %p80
      %p87 = scmp.eq.s32.totalorder %s19, 1
      %p88 = por %p86, %p87
      %p89 = scmp.ne.s32.totalorder %s81, %s84
      %p90 = scmp.eq.s32.totalorder %s19, 0
      %p91 = por %p89, %p90
      %p92 = scmp.ne.s32.totalorder %s81, %s84
      %p93 = scmp.eq.s32.totalorder %s24, 1
      %p94 = por %p92, %p93
      %p95 = scmp.ne.s32.totalorder %s84, %s85
      %p96 = scmp.eq.s32.totalorder %s24, 0
      %p97 = por %p95, %p96
      %p98 = scmp.ne.s32.totalorder %s84, %s85
      %p99 = scmp.eq.s32.totalorder %s25, 1
      %p100 = por %p98, %p99
      %p102 = scmp.ne.s32.totalorder %s85, %s101
      %p103 = scmp.eq.s32.totalorder %s25, 0
      %p104 = por %p102, %p103
      %s105 = ssub.s32 %s19, %s26
      %p106 = scmp.eq.s32.totalorder %s105, 0
      %s108 = sadd.s32 %s107, 1
      %s109 = scalar_select %p106, %s107, %s108
      %p112 = pneg %p106
      %p113 = scmp.eq.s32.totalorder %s19, 1
      %p114 = por %p112, %p113
      %p115 = scmp.ne.s32.totalorder %s107, %s110
      %p116 = scmp.eq.s32.totalorder %s19, 0
      %p117 = por %p115, %p116
      %p118 = scmp.ne.s32.totalorder %s107, %s110
      %p119 = scmp.eq.s32.totalorder %s24, 1
      %p120 = por %p118, %p119
      %p121 = scmp.ne.s32.totalorder %s110, %s111
      %p122 = scmp.eq.s32.totalorder %s24, 0
      %p123 = por %p121, %p122
      %p124 = scmp.ne.s32.totalorder %s110, %s111
      %p125 = scmp.eq.s32.totalorder %s25, 1
      %p126 = por %p124, %p125
      %p128 = scmp.ne.s32.totalorder %s111, %s127
      %p129 = scmp.eq.s32.totalorder %s25, 0
      %p130 = por %p128, %p129
      %s132 = sadd.s32 %s131, 1
      %p135 = scmp.eq.s32.totalorder %s19, 1
      %p136 = scmp.ne.s32.totalorder %s131, %s133
      %p137 = scmp.eq.s32.totalorder %s19, 0
      %p138 = por %p136, %p137
      %p139 = scmp.ne.s32.totalorder %s131, %s133
      %p140 = scmp.eq.s32.totalorder %s24, 1
      %p141 = por %p139, %p140
      %p142 = scmp.ne.s32.totalorder %s133, %s134
      %p143 = scmp.eq.s32.totalorder %s24, 0
      %p144 = por %p142, %p143
      %p145 = scmp.ne.s32.totalorder %s133, %s134
      %p146 = scmp.eq.s32.totalorder %s25, 1
      %p147 = por %p145, %p146
      %p149 = scmp.ne.s32.totalorder %s134, %s148
      %p150 = scmp.eq.s32.totalorder %s25, 0
      %p151 = por %p149, %p150
      %s153 = sadd.s32 %s152, 1
      %p156 = scmp.eq.s32.totalorder %s19, 1
      %p157 = scmp.ne.s32.totalorder %s152, %s154
      %p158 = scmp.eq.s32.totalorder %s19, 0
      %p159 = por %p157, %p158
      %p160 = scmp.ne.s32.totalorder %s152, %s154
      %p161 = scmp.eq.s32.totalorder %s24, 1
      %p162 = por %p160, %p161
      %p163 = scmp.ne.s32.totalorder %s154, %s155
      %p164 = scmp.eq.s32.totalorder %s24, 0
      %p165 = por %p163, %p164
      %p166 = scmp.ne.s32.totalorder %s154, %s155
      %p167 = scmp.eq.s32.totalorder %s25, 1
      %p168 = por %p166, %p167
      %p170 = scmp.ne.s32.totalorder %s155, %s169
      %p171 = scmp.eq.s32.totalorder %s25, 0
      %p172 = por %p170, %p171
      %s174 = sadd.s32 %s173, 1
      %p177 = scmp.eq.s32.totalorder %s19, 1
      %p178 = scmp.ne.s32.totalorder %s173, %s175
      %p179 = scmp.eq.s32.totalorder %s19, 0
      %p180 = por %p178, %p179
      %p181 = scmp.ne.s32.totalorder %s173, %s175
      %p182 = scmp.eq.s32.totalorder %s24, 1
      %p183 = por %p181, %p182
      %p184 = scmp.ne.s32.totalorder %s175, %s176
      %p185 = scmp.eq.s32.totalorder %s24, 0
      %p186 = por %p184, %p185
      %p187 = scmp.ne.s32.totalorder %s175, %s176
      %p188 = scmp.eq.s32.totalorder %s25, 1
      %p189 = por %p187, %p188
      %p191 = scmp.ne.s32.totalorder %s176, %s190
      %p192 = scmp.eq.s32.totalorder %s25, 0
      %p193 = por %p191, %p192
      %s194 = ssub.s32 %s19, %s26
      %p195 = scmp.eq.s32.totalorder %s194, 0
      %s197 = sadd.s32 %s196, 1
      %s198 = scalar_select %p195, %s196, %s197
      %p201 = pneg %p195
      %p202 = scmp.eq.s32.totalorder %s19, 1
      %p203 = por %p201, %p202
      %p204 = scmp.ne.s32.totalorder %s196, %s199
      %p205 = scmp.eq.s32.totalorder %s19, 0
      %p206 = por %p204, %p205
      %p207 = scmp.ne.s32.totalorder %s196, %s199
      %p208 = scmp.eq.s32.totalorder %s24, 1
      %p209 = por %p207, %p208
      %p210 = scmp.ne.s32.totalorder %s199, %s200
      %p211 = scmp.eq.s32.totalorder %s24, 0
      %p212 = por %p210, %p211
      %p213 = scmp.ne.s32.totalorder %s199, %s200
      %p214 = scmp.eq.s32.totalorder %s25, 1
      %p215 = por %p213, %p214
      %p217 = scmp.ne.s32.totalorder %s200, %s216
      %p218 = scmp.eq.s32.totalorder %s25, 0
      %p219 = por %p217, %p218
      %p220 = scmp.le.s32.totalorder 1, %s19
      %p221 = scmp.lt.s32.totalorder %s19, 3
      %p222 = pnand %p220, %p221
      %p223 = pneg %p222
      // Predicated region
      $region9: #{tpu_custom_call.1} parent=5 // pred_check
        _
      $region10: #{tpu_custom_call.1} parent=5 // pred_check_branch
        %225 = sbr.rel (%p222) target = $region12
      $region11: #{tpu_custom_call.1} parent=5 // pred_region
        %s226 = ssub.s32 %s19, 1
        // Predicated region
        $region13: #{tpu_custom_call.1} parent=11 // pred_check
          %p227 = pneg %p144
        $region14: #{tpu_custom_call.1} parent=11 // pred_check_branch
          %229 = sbr.rel (%p227) target = $region16
        $region15: #{tpu_custom_call.1} parent=11 // pred_region
          _
        $region16: #{tpu_custom_call.1} parent=11 // pred_fallthru
          _
        // Predicated region
        $region17: #{tpu_custom_call.1} parent=11 // pred_check
          %p230 = pneg %p165
        $region18: #{tpu_custom_call.1} parent=11 // pred_check_branch
          %232 = sbr.rel (%p230) target = $region20
        $region19: #{tpu_custom_call.1} parent=11 // pred_region
          _
        $region20: #{tpu_custom_call.1} parent=11 // pred_fallthru
          _
        // Predicated region
        $region21: #{tpu_custom_call.1} parent=11 // pred_check
          %p233 = pneg %p186
        $region22: #{tpu_custom_call.1} parent=11 // pred_check_branch
          %235 = sbr.rel (%p233) target = $region24
        $region23: #{tpu_custom_call.1} parent=11 // pred_region
          _
        $region24: #{tpu_custom_call.1} parent=11 // pred_fallthru
          _
      $region12: #{tpu_custom_call.1} parent=5 // pred_fallthru
        _
      %p236 = scmp.lt.s32.totalorder %s19, 2
      // Predicated region
      $region25: #{tpu_custom_call.1} parent=5 // pred_check
        %p237 = pneg %p236
      $region26: #{tpu_custom_call.1} parent=5 // pred_check_branch
        %239 = sbr.rel (%p237) target = $region28
      $region27: #{tpu_custom_call.1} parent=5 // pred_region
        // Predicated region
        $region29: #{tpu_custom_call.1} parent=27 // pred_check
          %p240 = pneg %p39
        $region30: #{tpu_custom_call.1} parent=27 // pred_check_branch
          %242 = sbr.rel (%p240) target = $region32
        $region31: #{tpu_custom_call.1} parent=27 // pred_region
          %s243 = sand.u32 %s29, 1
          %s244 = scalar_lea.sflag [#allocation3], %s243
          %s245 = sand.u32 %s29, 1
          %s246 = smul.addr %s245, 128
          %s247 = scalar_lea.vmem [#allocation2], %s246
          %s248 = smul.u32 16, %s19
          %s250 = ssub.s32 2048, 2048
          %251 = vsyncadd %s244, %s250
          %s252 = smul.addr %s248, 128
          %s253 = scalar_lea.hbm %s0, %s252
          %s254 = sshll.u32 %s247, 4
          %s255 = int_to_ptr.vmem [resolvable:$true] %s254
          %260 = dma.hbm_to_vmem [thread:$0]  %s253, 2048, %s255, %s244, 128, 128, 8
        $region32: #{tpu_custom_call.1} parent=27 // pred_fallthru
          _
        // Predicated region
        $region33: #{tpu_custom_call.1} parent=27 // pred_check
          %p261 = pneg %p65
        $region34: #{tpu_custom_call.1} parent=27 // pred_check_branch
          %263 = sbr.rel (%p261) target = $region36
        $region35: #{tpu_custom_call.1} parent=27 // pred_region
          %s264 = smul.u32 2, %s19
          %p265 = scmp.lt.s32.totalorder %s264, 3
          %s266 = scalar_select %p265, %s264, 3
          %s267 = smul.addr %s266, 8
          %s268 = scalar_lea.vmem %s1, %s267
          %s269 = smul.u32 2, %s19
        $region36: #{tpu_custom_call.1} parent=27 // pred_fallthru
          _
        // Predicated region
        $region37: #{tpu_custom_call.1} parent=27 // pred_check
          %p270 = pneg %p91
        $region38: #{tpu_custom_call.1} parent=27 // pred_check_branch
          %272 = sbr.rel (%p270) target = $region40
        $region39: #{tpu_custom_call.1} parent=27 // pred_region
          %s273 = smul.u32 2, %s19
          %p274 = scmp.lt.s32.totalorder %s273, 3
          %s275 = scalar_select %p274, %s273, 3
          %s276 = smul.addr %s275, 8
          %s277 = scalar_lea.vmem %s2, %s276
          %s278 = smul.u32 2, %s19
        $region40: #{tpu_custom_call.1} parent=27 // pred_fallthru
          _
        // Predicated region
        $region41: #{tpu_custom_call.1} parent=27 // pred_check
          %p279 = pneg %p117
        $region42: #{tpu_custom_call.1} parent=27 // pred_check_branch
          %281 = sbr.rel (%p279) target = $region44
        $region43: #{tpu_custom_call.1} parent=27 // pred_region
          %s282 = smul.u32 2, %s19
          %p283 = scmp.lt.s32.totalorder %s282, 3
          %s284 = scalar_select %p283, %s282, 3
          %s285 = smul.addr %s284, 8
          %s286 = scalar_lea.vmem %s3, %s285
          %s287 = smul.u32 2, %s19
        $region44: #{tpu_custom_call.1} parent=27 // pred_fallthru
          _
      $region28: #{tpu_custom_call.1} parent=5 // pred_fallthru
        _
      %p288 = scmp.le.s32.totalorder 1, %s19
      %p289 = scmp.lt.s32.totalorder %s19, 3
      %p290 = pnand %p288, %p289
      %p291 = pneg %p290
      // Predicated region
      $region45: #{tpu_custom_call.1} parent=5 // pred_check
        _
      $region46: #{tpu_custom_call.1} parent=5 // pred_check_branch
        %293 = sbr.rel (%p290) target = $region48
      $region47: #{tpu_custom_call.1} parent=5 // pred_region
        %s294 = ssub.s32 %s19, 1
        %s295 = sand.u32 %s32, 1
        %s296 = scalar_lea.sflag [#allocation3], %s295
        %s297 = sand.u32 %s32, 1
        %s298 = smul.addr %s297, 128
        %s299 = scalar_lea.vmem [#allocation2], %s298
        // Predicated region
        $region49: #{tpu_custom_call.1} parent=47 // pred_check
          %p300 = pneg %p45
        $region50: #{tpu_custom_call.1} parent=47 // pred_check_branch
          %302 = sbr.rel (%p300) target = $region52
        $region51: #{tpu_custom_call.1} parent=47 // pred_region
          %303 = dma.done %s296, 2048
        $region52: #{tpu_custom_call.1} parent=47 // pred_fallthru
          _
        %s304 = sand.u32 %s32, 1
        %s305 = scalar_lea.sflag [#allocation3], %s304
        %s306 = sand.u32 %s32, 1
        %s307 = smul.addr %s306, 128
        %s308 = scalar_lea.vmem [#allocation2], %s307
        %p309 = pneg %p45
        %p310 = pneg %p42
        %s311 = smul.u32 2, %s24
        %p312 = scmp.lt.s32.totalorder %s311, 3
        %s313 = scalar_select %p312, %s311, 3
        %s314 = smul.addr %s313, 8
        %s315 = scalar_lea.vmem %s1, %s314
        %p316 = pneg %p71
        %p317 = pneg %p68
        %s318 = smul.u32 2, %s24
        %p319 = scmp.lt.s32.totalorder %s318, 3
        %s320 = scalar_select %p319, %s318, 3
        %s321 = smul.addr %s320, 8
        %s322 = scalar_lea.vmem %s2, %s321
        %p323 = pneg %p97
        %p324 = pneg %p94
        %s325 = smul.u32 2, %s24
        %p326 = scmp.lt.s32.totalorder %s325, 3
        %s327 = scalar_select %p326, %s325, 3
        %s328 = smul.addr %s327, 8
        %s329 = scalar_lea.vmem %s3, %s328
        %p330 = pneg %p123
        %p331 = pneg %p120
        %p332 = pneg %p144
        %p333 = pneg %p141
        %p334 = pneg %p165
        %p335 = pneg %p162
        %p336 = pneg %p186
        %p337 = pneg %p183
        %p338 = pneg %p212
        %p339 = pneg %p209
        %s340 = sand.u32 %s199, 1
        %s341 = scalar_lea.sflag [#allocation4], %s340
        %s342 = sand.u32 %s199, 1
        %s343 = smul.addr %s342, 16
        %s344 = scalar_lea.vmem [#allocation5], %s343
        %s345 = smul.u32 16, %s24
        %s346 = smul.u32 2, %s24
        %p347 = scmp.lt.s32.totalorder %s346, 3
        %s348 = scalar_select %p347, %s346, 3
        %s349 = smul.addr %s348, 8
        %s350 = scalar_lea.vmem %s1, %s349
        %s351 = smul.u32 2, %s24
        %s352 = smul.u32 2, %s24
        %p353 = scmp.lt.s32.totalorder %s352, 3
        %s354 = scalar_select %p353, %s352, 3
        %s355 = smul.addr %s354, 8
        %s356 = scalar_lea.vmem %s2, %s355
        %s357 = smul.u32 2, %s24
        %s358 = smul.u32 2, %s24
        %p359 = scmp.lt.s32.totalorder %s358, 3
        %s360 = scalar_select %p359, %s358, 3
        %s361 = smul.addr %s360, 8
        %s362 = scalar_lea.vmem %s3, %s361
        %s363 = smul.u32 2, %s24
        %s364 = smul.u32 2, %s24
        %v365 = vld [vmem:[%s299] sm:$0xff]
        %v366 = vld [vmem:[%s299 + $0x8] sm:$0xff]
        %v367 = vld [vmem:[%s299 + $0x10] sm:$0xff]
        %v368 = vld [vmem:[%s299 + $0x18] sm:$0xff]
        %v369 = vld [vmem:[%s299 + $0x20] sm:$0xff]
        %v370 = vld [vmem:[%s299 + $0x28] sm:$0xff]
        %v371 = vld [vmem:[%s299 + $0x30] sm:$0xff]
        %v372 = vld [vmem:[%s299 + $0x38] sm:$0xff]
        %v373 = vld [vmem:[%s299 + $0x40] sm:$0xff]
        %v374 = vld [vmem:[%s299 + $0x48] sm:$0xff]
        %v375 = vld [vmem:[%s299 + $0x50] sm:$0xff]
        %v376 = vld [vmem:[%s299 + $0x58] sm:$0xff]
        %v377 = vld [vmem:[%s299 + $0x60] sm:$0xff]
        %v378 = vld [vmem:[%s299 + $0x68] sm:$0xff]
        %v379 = vld [vmem:[%s299 + $0x70] sm:$0xff]
        %v380 = vld [vmem:[%s299 + $0x78] sm:$0xff]
        %v381 = vld [vmem:[%s4] sm:$0xff]
        %v382 = vld [vmem:[%s4 + $0x8] sm:$0xff]
        %v383 = vld [vmem:[%s4 + $0x10] sm:$0xff]
        %v384 = vld [vmem:[%s4 + $0x18] sm:$0xff]
        %vm385 = vcmask 261120
        %v387 = vsel %vm385, %v365, 0
        %v390 = vsel %vm385, %v366, 0
        %v393 = vsel %vm385, %v367, 0
        %v396 = vsel %vm385, %v368, 0
        %v399 = vsel %vm385, %v369, 0
        %v402 = vsel %vm385, %v370, 0
        %v405 = vsel %vm385, %v371, 0
        %v408 = vsel %vm385, %v372, 0
        %v411 = vsel %vm385, %v373, 0
        %v414 = vsel %vm385, %v374, 0
        %v417 = vsel %vm385, %v375, 0
        %v420 = vsel %vm385, %v376, 0
        %v423 = vsel %vm385, %v377, 0
        %v426 = vsel %vm385, %v378, 0
        %v429 = vsel %vm385, %v379, 0
        %v432 = vsel %vm385, %v380, 0
        %434 = vmatprep.subr.mxu0 0.0
        %435 = vmatpush1.msra.mxu0 %v381
        %436 = vmatprep.subr.mxu0 0.0
        %437 = vmatpush1.msra.mxu0 %v382
        %438 = vmatprep.subr.mxu0 0.0
        %439 = vmatpush1.msra.mxu0 %v383
        %440 = vmatprep.subr.mxu0 0.0
        %441 = vmatpush1.msra.mxu0 %v384
        %442 = vmatprep.subr.mxu0 0.0
        %443 = vmatpush1.msra.mxu0 0.0
        %444 = vmatprep.subr.mxu0 0.0
        %445 = vmatpush1.msra.mxu0 0.0
        %446 = vmatprep.subr.mxu0 0.0
        %447 = vmatpush1.msra.mxu0 0.0
        %448 = vmatprep.subr.mxu0 0.0
        %449 = vmatpush1.msra.mxu0 0.0
        %450 = vmatprep.subr.mxu0 0.0
        %451 = vmatpush1.msra.mxu0 0.0
        %452 = vmatprep.subr.mxu0 0.0
        %453 = vmatpush1.msra.mxu0 0.0
        %454 = vmatprep.subr.mxu0 0.0
        %455 = vmatpush1.msra.mxu0 0.0
        %456 = vmatprep.subr.mxu0 0.0
        %457 = vmatpush1.msra.mxu0 0.0
        %458 = vmatprep.subr.mxu0 0.0
        %459 = vmatpush1.msra.mxu0 0.0
        %460 = vmatprep.subr.mxu0 0.0
        %461 = vmatpush1.msra.mxu0 0.0
        %462 = vmatprep.subr.mxu0 0.0
        %463 = vmatpush1.msra.mxu0 0.0
        %464 = vmatprep.subr.mxu0 0.0
        %465 = vmatpush1.msra.mxu0 0.0
        %466 = vmatprep.subr.mxu0 0.0
        %467 = vmatpush1.msra.mxu0 0.0
        %468 = vmatprep.subr.mxu0 0.0
        %469 = vmatpush1.msra.mxu0 0.0
        %470 = vmatprep.subr.mxu0 0.0
        %471 = vmatpush1.msra.mxu0 0.0
        %472 = vmatprep.subr.mxu0 0.0
        %473 = vmatpush1.msra.mxu0 0.0
        %474 = vmatprep.subr.mxu0 0.0
        %475 = vmatpush1.msra.mxu0 0.0
        %476 = vmatprep.subr.mxu0 0.0
        %477 = vmatpush1.msra.mxu0 0.0
        %478 = vmatprep.subr.mxu0 0.0
        %479 = vmatpush1.msra.mxu0 0.0
        %480 = vmatprep.subr.mxu0 0.0
        %481 = vmatpush1.msra.mxu0 0.0
        %482 = vmatprep.subr.mxu0 0.0
        %483 = vmatpush1.msra.mxu0 0.0
        %484 = vmatprep.subr.mxu0 0.0
        %485 = vmatpush1.msra.mxu0 0.0
        %486 = vmatprep.subr.mxu0 0.0
        %487 = vmatpush1.msra.mxu0 0.0
        %488 = vmatprep.subr.mxu0 0.0
        %489 = vmatpush1.msra.mxu0 0.0
        %490 = vmatprep.subr.mxu0 0.0
        %491 = vmatpush1.msra.mxu0 0.0
        %492 = vmatprep.subr.mxu0 0.0
        %493 = vmatpush1.msra.mxu0 0.0
        %494 = vmatprep.subr.mxu0 0.0
        %495 = vmatpush1.msra.mxu0 0.0
        %496 = vmatprep.subr.mxu0 0.0
        %497 = vmatpush1.msra.mxu0 0.0
        %498 = vmatprep.mubr.f32.mxu0 0.0
        %499 = vmatmul.mubr.f32.gmra.mrb[0].mxu0 %v387
        %v500 = vpop.f32.mrb[0].mxu0
        %v501 = vadd.f32 0.0, %v500
        %v502 = vpop.f32.mrb[0].mxu0
        %503 = vmatprep.mubr.f32.mxu0 0.0
        %504 = vmatmul.mubr.f32.gmra.mrb[0].mxu0 %v390
        %v505 = vpop.f32.mrb[0].mxu0
        %v506 = vadd.f32 0.0, %v505
        %v507 = vpop.f32.mrb[0].mxu0
        %508 = vmatprep.mubr.f32.mxu0 0.0
        %509 = vmatmul.mubr.f32.gmra.mrb[0].mxu0 %v393
        %v510 = vpop.f32.mrb[0].mxu0
        %v511 = vadd.f32 0.0, %v510
        %v512 = vpop.f32.mrb[0].mxu0
        %513 = vmatprep.mubr.f32.mxu0 0.0
        %514 = vmatmul.mubr.f32.gmra.mrb[0].mxu0 %v396
        %v515 = vpop.f32.mrb[0].mxu0
        %v516 = vadd.f32 0.0, %v515
        %v517 = vpop.f32.mrb[0].mxu0
        %518 = vmatprep.mubr.f32.mxu0 0.0
        %519 = vmatmul.mubr.f32.gmra.mrb[0].mxu0 %v399
        %v520 = vpop.f32.mrb[0].mxu0
        %v521 = vadd.f32 0.0, %v520
        %v522 = vpop.f32.mrb[0].mxu0
        %523 = vmatprep.mubr.f32.mxu0 0.0
        %524 = vmatmul.mubr.f32.gmra.mrb[0].mxu0 %v402
        %v525 = vpop.f32.mrb[0].mxu0
        %v526 = vadd.f32 0.0, %v525
        %v527 = vpop.f32.mrb[0].mxu0
        %528 = vmatprep.mubr.f32.mxu0 0.0
        %529 = vmatmul.mubr.f32.gmra.mrb[0].mxu0 %v405
        %v530 = vpop.f32.mrb[0].mxu0
        %v531 = vadd.f32 0.0, %v530
        %v532 = vpop.f32.mrb[0].mxu0
        %533 = vmatprep.mubr.f32.mxu0 0.0
        %534 = vmatmul.mubr.f32.gmra.mrb[0].mxu0 %v408
        %v535 = vpop.f32.mrb[0].mxu0
        %v536 = vadd.f32 0.0, %v535
        %v537 = vpop.f32.mrb[0].mxu0
        %538 = vmatprep.mubr.f32.mxu0 0.0
        %539 = vmatmul.mubr.f32.gmra.mrb[0].mxu0 %v411
        %v540 = vpop.f32.mrb[0].mxu0
        %v541 = vadd.f32 0.0, %v540
        %v542 = vpop.f32.mrb[0].mxu0
        %543 = vmatprep.mubr.f32.mxu0 0.0
        %544 = vmatmul.mubr.f32.gmra.mrb[0].mxu0 %v414
        %v545 = vpop.f32.mrb[0].mxu0
        %v546 = vadd.f32 0.0, %v545
        %v547 = vpop.f32.mrb[0].mxu0
        %548 = vmatprep.mubr.f32.mxu0 0.0
        %549 = vmatmul.mubr.f32.gmra.mrb[0].mxu0 %v417
        %v550 = vpop.f32.mrb[0].mxu0
        %v551 = vadd.f32 0.0, %v550
        %v552 = vpop.f32.mrb[0].mxu0
        %553 = vmatprep.mubr.f32.mxu0 0.0
        %554 = vmatmul.mubr.f32.gmra.mrb[0].mxu0 %v420
        %v555 = vpop.f32.mrb[0].mxu0
        %v556 = vadd.f32 0.0, %v555
        %v557 = vpop.f32.mrb[0].mxu0
        %558 = vmatprep.mubr.f32.mxu0 0.0
        %559 = vmatmul.mubr.f32.gmra.mrb[0].mxu0 %v423
        %v560 = vpop.f32.mrb[0].mxu0
        %v561 = vadd.f32 0.0, %v560
        %v562 = vpop.f32.mrb[0].mxu0
        %563 = vmatprep.mubr.f32.mxu0 0.0
        %564 = vmatmul.mubr.f32.gmra.mrb[0].mxu0 %v426
        %v565 = vpop.f32.mrb[0].mxu0
        %v566 = vadd.f32 0.0, %v565
        %v567 = vpop.f32.mrb[0].mxu0
        %568 = vmatprep.mubr.f32.mxu0 0.0
        %569 = vmatmul.mubr.f32.gmra.mrb[0].mxu0 %v429
        %v570 = vpop.f32.mrb[0].mxu0
        %v571 = vadd.f32 0.0, %v570
        %v572 = vpop.f32.mrb[0].mxu0
        %573 = vmatprep.mubr.f32.mxu0 0.0
        %574 = vmatmul.mubr.f32.gmra.mrb[0].mxu0 %v432
        %v575 = vpop.f32.mrb[0].mxu0
        %v576 = vadd.f32 0.0, %v575
        %v577 = vpop.f32.mrb[0].mxu0
        %578 = vdwg.mxu0
        %v579 = vld [vmem:[%s350] sm:$0xff]
        %v580 = vld [vmem:[%s350 + $0x8] sm:$0xff]
        %v581 = vld [vmem:[%s5] sm:$0xff]
        %v582 = vld [vmem:[%s5 + $0x8] sm:$0xff]
        %v583 = vld [vmem:[%s5 + $0x10] sm:$0xff]
        %v584 = vld [vmem:[%s5 + $0x18] sm:$0xff]
        %v585 = vld [vmem:[%s5 + $0x20] sm:$0xff]
        %v586 = vld [vmem:[%s5 + $0x28] sm:$0xff]
        %v587 = vld [vmem:[%s5 + $0x30] sm:$0xff]
        %v588 = vld [vmem:[%s5 + $0x38] sm:$0xff]
        %v589 = vld [vmem:[%s5 + $0x40] sm:$0x1]
        %vm590 = vcmask 531456
        %v592 = vsel %vm590, %v579, 0
        %v595 = vsel %vm590, %v580, 0
        %vm597 = vcmask 1040384
        %v599 = vsel %vm597, %v589, 0
        %601 = vmatprep.subr.mxu0 0.0
        %602 = vmatpush1.msra.mxu0 %v581
        %603 = vmatprep.subr.mxu0 0.0
        %604 = vmatpush1.msra.mxu0 %v582
        %605 = vmatprep.subr.mxu0 0.0
        %606 = vmatpush1.msra.mxu0 %v583
        %607 = vmatprep.subr.mxu0 0.0
        %608 = vmatpush1.msra.mxu0 %v584
        %609 = vmatprep.subr.mxu0 0.0
        %610 = vmatpush1.msra.mxu0 %v585
        %611 = vmatprep.subr.mxu0 0.0
        %612 = vmatpush1.msra.mxu0 %v586
        %613 = vmatprep.subr.mxu0 0.0
        %614 = vmatpush1.msra.mxu0 %v587
        %615 = vmatprep.subr.mxu0 0.0
        %616 = vmatpush1.msra.mxu0 %v588
        %617 = vmatprep.subr.mxu0 0.0
        %618 = vmatpush1.msra.mxu0 %v599
        %619 = vmatprep.subr.mxu0 0.0
        %620 = vmatpush1.msra.mxu0 0.0
        %621 = vmatprep.subr.mxu0 0.0
        %622 = vmatpush1.msra.mxu0 0.0
        %623 = vmatprep.subr.mxu0 0.0
        %624 = vmatpush1.msra.mxu0 0.0
        %625 = vmatprep.subr.mxu0 0.0
        %626 = vmatpush1.msra.mxu0 0.0
        %627 = vmatprep.subr.mxu0 0.0
        %628 = vmatpush1.msra.mxu0 0.0
        %629 = vmatprep.subr.mxu0 0.0
        %630 = vmatpush1.msra.mxu0 0.0
        %631 = vmatprep.subr.mxu0 0.0
        %632 = vmatpush1.msra.mxu0 0.0
        %633 = vmatprep.subr.mxu0 0.0
        %634 = vmatpush1.msra.mxu0 0.0
        %635 = vmatprep.subr.mxu0 0.0
        %636 = vmatpush1.msra.mxu0 0.0
        %637 = vmatprep.subr.mxu0 0.0
        %638 = vmatpush1.msra.mxu0 0.0
        %639 = vmatprep.subr.mxu0 0.0
        %640 = vmatpush1.msra.mxu0 0.0
        %641 = vmatprep.subr.mxu0 0.0
        %642 = vmatpush1.msra.mxu0 0.0
        %643 = vmatprep.subr.mxu0 0.0
        %644 = vmatpush1.msra.mxu0 0.0
        %645 = vmatprep.subr.mxu0 0.0
        %646 = vmatpush1.msra.mxu0 0.0
        %647 = vmatprep.subr.mxu0 0.0
        %648 = vmatpush1.msra.mxu0 0.0
        %649 = vmatprep.subr.mxu0 0.0
        %650 = vmatpush1.msra.mxu0 0.0
        %651 = vmatprep.subr.mxu0 0.0
        %652 = vmatpush1.msra.mxu0 0.0
        %653 = vmatprep.subr.mxu0 0.0
        %654 = vmatpush1.msra.mxu0 0.0
        %655 = vmatprep.subr.mxu0 0.0
        %656 = vmatpush1.msra.mxu0 0.0
        %657 = vmatprep.subr.mxu0 0.0
        %658 = vmatpush1.msra.mxu0 0.0
        %659 = vmatprep.subr.mxu0 0.0
        %660 = vmatpush1.msra.mxu0 0.0
        %661 = vmatprep.subr.mxu0 0.0
        %662 = vmatpush1.msra.mxu0 0.0
        %663 = vmatprep.subr.mxu0 0.0
        %664 = vmatpush1.msra.mxu0 0.0
        %665 = vmatprep.mubr.f32.mxu0 0.0
        %666 = vmatmul.mubr.f32.gmra.mrb[0].mxu0 %v592
        %v667 = vpop.f32.mrb[0].mxu0
        %v668 = vadd.f32 0.0, %v667
        %v669 = vpop.f32.mrb[0].mxu0
        %670 = vmatprep.mubr.f32.mxu0 0.0
        %671 = vmatmul.mubr.f32.gmra.mrb[0].mxu0 %v595
        %v672 = vpop.f32.mrb[0].mxu0
        %v673 = vadd.f32 0.0, %v672
        %v674 = vpop.f32.mrb[0].mxu0
        %675 = vdwg.mxu0
        %v678 = vcombine.high %v668, %v668
        %v680 = vunpack.c.l.s4 1966171168
        %v681 = vunpack.c.0.s8 %v680
        %v682 = vlaneseq
        %v683 = vshrl.u32 %v682, 7
        %v684 = vsub.s32 %v681, %v683
        %v685 = vrot.slane %v668, %v684
        %v687 = vunpack.c.l.s4 1966171168
        %v688 = vunpack.c.0.s8 %v687
        %v689 = vlaneseq
        %v690 = vshrl.u32 %v689, 7
        %v691 = vsub.s32 %v688, %v690
        %v692 = vrot.slane %v678, %v691
        %v693 = vcombine.high %v685, %v685
        %v694 = vcombine.high %v692, %v692
        %v696 = vunpack.c.l.s4 1966171168
        %v697 = vunpack.c.0.s8 %v696
        %v698 = vlaneseq
        %v699 = vshrl.u32 %v698, 7
        %v700 = vsub.s32 %v697, %v699
        %v701 = vrot.slane %v685, %v700
        %v703 = vunpack.c.l.s4 1966171168
        %v704 = vunpack.c.0.s8 %v703
        %v705 = vlaneseq
        %v706 = vshrl.u32 %v705, 7
        %v707 = vsub.s32 %v704, %v706
        %v708 = vrot.slane %v692, %v707
        %v710 = vunpack.c.l.s4 1966171168
        %v711 = vunpack.c.0.s8 %v710
        %v712 = vlaneseq
        %v713 = vshrl.u32 %v712, 7
        %v714 = vsub.s32 %v711, %v713
        %v715 = vrot.slane %v693, %v714
        %v717 = vunpack.c.l.s4 1966171168
        %v718 = vunpack.c.0.s8 %v717
        %v719 = vlaneseq
        %v720 = vshrl.u32 %v719, 7
        %v721 = vsub.s32 %v718, %v720
        %v722 = vrot.slane %v694, %v721
        %v723 = vcombine.high %v701, %v701
        %v724 = vcombine.high %v708, %v708
        %v725 = vcombine.high %v715, %v715
        %v726 = vcombine.high %v722, %v722
        %v727 = vcombine.high %v673, %v673
        %v729 = vunpack.c.l.s4 1966171168
        %v730 = vunpack.c.0.s8 %v729
        %v731 = vlaneseq
        %v732 = vshrl.u32 %v731, 7
        %v733 = vsub.s32 %v730, %v732
        %v734 = vrot.slane %v673, %v733
        %v736 = vunpack.c.l.s4 1966171168
        %v737 = vunpack.c.0.s8 %v736
        %v738 = vlaneseq
        %v739 = vshrl.u32 %v738, 7
        %v740 = vsub.s32 %v737, %v739
        %v741 = vrot.slane %v727, %v740
        %v742 = vcombine.high %v734, %v734
        %v743 = vcombine.high %v741, %v741
        %v745 = vunpack.c.l.s4 1966171168
        %v746 = vunpack.c.0.s8 %v745
        %v747 = vlaneseq
        %v748 = vshrl.u32 %v747, 7
        %v749 = vsub.s32 %v746, %v748
        %v750 = vrot.slane %v734, %v749
        %v752 = vunpack.c.l.s4 1966171168
        %v753 = vunpack.c.0.s8 %v752
        %v754 = vlaneseq
        %v755 = vshrl.u32 %v754, 7
        %v756 = vsub.s32 %v753, %v755
        %v757 = vrot.slane %v741, %v756
        %v759 = vunpack.c.l.s4 1966171168
        %v760 = vunpack.c.0.s8 %v759
        %v761 = vlaneseq
        %v762 = vshrl.u32 %v761, 7
        %v763 = vsub.s32 %v760, %v762
        %v764 = vrot.slane %v742, %v763
        %v766 = vunpack.c.l.s4 1966171168
        %v767 = vunpack.c.0.s8 %v766
        %v768 = vlaneseq
        %v769 = vshrl.u32 %v768, 7
        %v770 = vsub.s32 %v767, %v769
        %v771 = vrot.slane %v743, %v770
        %v772 = vcombine.high %v750, %v750
        %v773 = vcombine.high %v757, %v757
        %v774 = vcombine.high %v764, %v764
        %v775 = vcombine.high %v771, %v771
        %v776 = vlaneseq
        %v777 = vshrl.u32 %v776, 7
        %v778 = vsub.s32 0, %v777
        %v779 = vrot.slane %v701, %v778
        %v780 = vlaneseq
        %v781 = vshrl.u32 %v780, 7
        %v782 = vsub.s32 0, %v781
        %v783 = vrot.slane %v715, %v782
        %v784 = vlaneseq
        %v785 = vshrl.u32 %v784, 7
        %v786 = vsub.s32 0, %v785
        %v787 = vrot.slane %v723, %v786
        %v788 = vlaneseq
        %v789 = vshrl.u32 %v788, 7
        %v790 = vsub.s32 0, %v789
        %v791 = vrot.slane %v725, %v790
        %v792 = vlaneseq
        %v793 = vshrl.u32 %v792, 7
        %v794 = vsub.s32 0, %v793
        %v795 = vrot.slane %v708, %v794
        %v796 = vlaneseq
        %v797 = vshrl.u32 %v796, 7
        %v798 = vsub.s32 0, %v797
        %v799 = vrot.slane %v722, %v798
        %v800 = vlaneseq
        %v801 = vshrl.u32 %v800, 7
        %v802 = vsub.s32 0, %v801
        %v803 = vrot.slane %v724, %v802
        %v804 = vlaneseq
        %v805 = vshrl.u32 %v804, 7
        %v806 = vsub.s32 0, %v805
        %v807 = vrot.slane %v726, %v806
        %v808 = vlaneseq
        %v809 = vshrl.u32 %v808, 7
        %v810 = vsub.s32 0, %v809
        %v811 = vrot.slane %v750, %v810
        %v812 = vlaneseq
        %v813 = vshrl.u32 %v812, 7
        %v814 = vsub.s32 0, %v813
        %v815 = vrot.slane %v764, %v814
        %v816 = vlaneseq
        %v817 = vshrl.u32 %v816, 7
        %v818 = vsub.s32 0, %v817
        %v819 = vrot.slane %v772, %v818
        %v820 = vlaneseq
        %v821 = vshrl.u32 %v820, 7
        %v822 = vsub.s32 0, %v821
        %v823 = vrot.slane %v774, %v822
        %v824 = vlaneseq
        %v825 = vshrl.u32 %v824, 7
        %v826 = vsub.s32 0, %v825
        %v827 = vrot.slane %v757, %v826
        %v828 = vlaneseq
        %v829 = vshrl.u32 %v828, 7
        %v830 = vsub.s32 0, %v829
        %v831 = vrot.slane %v771, %v830
        %v832 = vlaneseq
        %v833 = vshrl.u32 %v832, 7
        %v834 = vsub.s32 0, %v833
        %v835 = vrot.slane %v773, %v834
        %v836 = vlaneseq
        %v837 = vshrl.u32 %v836, 7
        %v838 = vsub.s32 0, %v837
        %v839 = vrot.slane %v775, %v838
        %v856 = vadd.f32 %v779, %v501
        %v857 = vadd.f32 %v783, %v506
        %v858 = vadd.f32 %v787, %v511
        %v859 = vadd.f32 %v791, %v516
        %v860 = vadd.f32 %v795, %v521
        %v861 = vadd.f32 %v799, %v526
        %v862 = vadd.f32 %v803, %v531
        %v863 = vadd.f32 %v807, %v536
        %v864 = vadd.f32 %v811, %v541
        %v865 = vadd.f32 %v815, %v546
        %v866 = vadd.f32 %v819, %v551
        %v867 = vadd.f32 %v823, %v556
        %v868 = vadd.f32 %v827, %v561
        %v869 = vadd.f32 %v831, %v566
        %v870 = vadd.f32 %v835, %v571
        %v871 = vadd.f32 %v839, %v576
        %v872 = vxor.u32 %v856, 2147483648
        %v873 = vxor.u32 %v857, 2147483648
        %v874 = vxor.u32 %v858, 2147483648
        %v875 = vxor.u32 %v859, 2147483648
        %v876 = vxor.u32 %v860, 2147483648
        %v877 = vxor.u32 %v861, 2147483648
        %v878 = vxor.u32 %v862, 2147483648
        %v879 = vxor.u32 %v863, 2147483648
        %v880 = vxor.u32 %v864, 2147483648
        %v881 = vxor.u32 %v865, 2147483648
        %v882 = vxor.u32 %v866, 2147483648
        %v883 = vxor.u32 %v867, 2147483648
        %v884 = vxor.u32 %v868, 2147483648
        %v885 = vxor.u32 %v869, 2147483648
        %v886 = vxor.u32 %v870, 2147483648
        %v887 = vxor.u32 %v871, 2147483648
        %v888 = vmul.f32 %v872, 1.442695
        %v889 = vpow.pop %v888
        %v890 = vmul.f32 %v873, 1.442695
        %v891 = vpow.pop %v890
        %v892 = vmul.f32 %v874, 1.442695
        %v893 = vpow.pop %v892
        %v894 = vmul.f32 %v875, 1.442695
        %v895 = vpow.pop %v894
        %v896 = vmul.f32 %v876, 1.442695
        %v897 = vpow.pop %v896
        %v898 = vmul.f32 %v877, 1.442695
        %v899 = vpow.pop %v898
        %v900 = vmul.f32 %v878, 1.442695
        %v901 = vpow.pop %v900
        %v902 = vmul.f32 %v879, 1.442695
        %v903 = vpow.pop %v902
        %v904 = vmul.f32 %v880, 1.442695
        %v905 = vpow.pop %v904
        %v906 = vmul.f32 %v881, 1.442695
        %v907 = vpow.pop %v906
        %v908 = vmul.f32 %v882, 1.442695
        %v909 = vpow.pop %v908
        %v910 = vmul.f32 %v883, 1.442695
        %v911 = vpow.pop %v910
        %v912 = vmul.f32 %v884, 1.442695
        %v913 = vpow.pop %v912
        %v914 = vmul.f32 %v885, 1.442695
        %v915 = vpow.pop %v914
        %v916 = vmul.f32 %v886, 1.442695
        %v917 = vpow.pop %v916
        %v918 = vmul.f32 %v887, 1.442695
        %v919 = vpow.pop %v918
        %v920 = vadd.f32 %v889, 1.0
        %v921 = vadd.f32 %v891, 1.0
        %v922 = vadd.f32 %v893, 1.0
        %v923 = vadd.f32 %v895, 1.0
        %v924 = vadd.f32 %v897, 1.0
        %v925 = vadd.f32 %v899, 1.0
        %v926 = vadd.f32 %v901, 1.0
        %v927 = vadd.f32 %v903, 1.0
        %v928 = vadd.f32 %v905, 1.0
        %v929 = vadd.f32 %v907, 1.0
        %v930 = vadd.f32 %v909, 1.0
        %v931 = vadd.f32 %v911, 1.0
        %v932 = vadd.f32 %v913, 1.0
        %v933 = vadd.f32 %v915, 1.0
        %v934 = vadd.f32 %v917, 1.0
        %v935 = vadd.f32 %v919, 1.0
        %v936 = vrcp.pop %v920
        %v937 = vmul.f32 1.0, %v936
        %v938 = vrcp.pop %v921
        %v939 = vmul.f32 1.0, %v938
        %v940 = vrcp.pop %v922
        %v941 = vmul.f32 1.0, %v940
        %v942 = vrcp.pop %v923
        %v943 = vmul.f32 1.0, %v942
        %v944 = vrcp.pop %v924
        %v945 = vmul.f32 1.0, %v944
        %v946 = vrcp.pop %v925
        %v947 = vmul.f32 1.0, %v946
        %v948 = vrcp.pop %v926
        %v949 = vmul.f32 1.0, %v948
        %v950 = vrcp.pop %v927
        %v951 = vmul.f32 1.0, %v950
        %v952 = vrcp.pop %v928
        %v953 = vmul.f32 1.0, %v952
        %v954 = vrcp.pop %v929
        %v955 = vmul.f32 1.0, %v954
        %v956 = vrcp.pop %v930
        %v957 = vmul.f32 1.0, %v956
        %v958 = vrcp.pop %v931
        %v959 = vmul.f32 1.0, %v958
        %v960 = vrcp.pop %v932
        %v961 = vmul.f32 1.0, %v960
        %v962 = vrcp.pop %v933
        %v963 = vmul.f32 1.0, %v962
        %v964 = vrcp.pop %v934
        %v965 = vmul.f32 1.0, %v964
        %v966 = vrcp.pop %v935
        %v967 = vmul.f32 1.0, %v966
        %v968 = vld [vmem:[%s6] sm:$0x1]
        %v970 = vlaneseq
        %v971 = vshrl.u32 %v970, 7
        %v972 = vsub.s32 0, %v971
        %v973 = vrot.slane %v968, %v972
        %v975 = vmul.f32 %v937, %v973
        %v976 = vmul.f32 %v939, %v973
        %v977 = vmul.f32 %v941, %v973
        %v978 = vmul.f32 %v943, %v973
        %v979 = vmul.f32 %v945, %v973
        %v980 = vmul.f32 %v947, %v973
        %v981 = vmul.f32 %v949, %v973
        %v982 = vmul.f32 %v951, %v973
        %v983 = vmul.f32 %v953, %v973
        %v984 = vmul.f32 %v955, %v973
        %v985 = vmul.f32 %v957, %v973
        %v986 = vmul.f32 %v959, %v973
        %v987 = vmul.f32 %v961, %v973
        %v988 = vmul.f32 %v963, %v973
        %v989 = vmul.f32 %v965, %v973
        %v990 = vmul.f32 %v967, %v973
        %v991 = vsel %vm385, %v975, 0.0
        %992 = vadd.xlane.f32.xlu0 %v991
        %v993 = vpop.xlane.xlu0 %992
        %v994 = vsel %vm385, %v976, 0.0
        %995 = vadd.xlane.f32.xlu0 %v994
        %v996 = vpop.xlane.xlu0 %995
        %v997 = vsel %vm385, %v977, 0.0
        %998 = vadd.xlane.f32.xlu0 %v997
        %v999 = vpop.xlane.xlu0 %998
        %v1000 = vsel %vm385, %v978, 0.0
        %1001 = vadd.xlane.f32.xlu0 %v1000
        %v1002 = vpop.xlane.xlu0 %1001
        %v1003 = vsel %vm385, %v979, 0.0
        %1004 = vadd.xlane.f32.xlu0 %v1003
        %v1005 = vpop.xlane.xlu0 %1004
        %v1006 = vsel %vm385, %v980, 0.0
        %1007 = vadd.xlane.f32.xlu0 %v1006
        %v1008 = vpop.xlane.xlu0 %1007
        %v1009 = vsel %vm385, %v981, 0.0
        %1010 = vadd.xlane.f32.xlu0 %v1009
        %v1011 = vpop.xlane.xlu0 %1010
        %v1012 = vsel %vm385, %v982, 0.0
        %1013 = vadd.xlane.f32.xlu0 %v1012
        %v1014 = vpop.xlane.xlu0 %1013
        %v1015 = vsel %vm385, %v983, 0.0
        %1016 = vadd.xlane.f32.xlu0 %v1015
        %v1017 = vpop.xlane.xlu0 %1016
        %v1018 = vsel %vm385, %v984, 0.0
        %1019 = vadd.xlane.f32.xlu0 %v1018
        %v1020 = vpop.xlane.xlu0 %1019
        %v1021 = vsel %vm385, %v985, 0.0
        %1022 = vadd.xlane.f32.xlu0 %v1021
        %v1023 = vpop.xlane.xlu0 %1022
        %v1024 = vsel %vm385, %v986, 0.0
        %1025 = vadd.xlane.f32.xlu0 %v1024
        %v1026 = vpop.xlane.xlu0 %1025
        %v1027 = vsel %vm385, %v987, 0.0
        %1028 = vadd.xlane.f32.xlu0 %v1027
        %v1029 = vpop.xlane.xlu0 %1028
        %v1030 = vsel %vm385, %v988, 0.0
        %1031 = vadd.xlane.f32.xlu0 %v1030
        %v1032 = vpop.xlane.xlu0 %1031
        %v1033 = vsel %vm385, %v989, 0.0
        %1034 = vadd.xlane.f32.xlu0 %v1033
        %v1035 = vpop.xlane.xlu0 %1034
        %v1036 = vsel %vm385, %v990, 0.0
        %1037 = vadd.xlane.f32.xlu0 %v1036
        %v1038 = vpop.xlane.xlu0 %1037
        %v1039 = vld [vmem:[%s356] sm:$0xff]
        %v1040 = vld [vmem:[%s356 + $0x8] sm:$0xff]
        %v1041 = vlog2.pop %v1039
        %v1042 = vmul.f32 %v1041, 0.6931472
        %v1043 = vlog2.pop %v1040
        %v1044 = vmul.f32 %v1043, 0.6931472
        %v1047 = vlaneseq
        %v1048 = vshrl.u32 %v1047, 7
        %v1049 = vsub.s32 0, %v1048
        %v1050 = vrot.slane %v1042, %v1049
        %1052 = vbcast.lane.b32.xlu0 %v1050, 256
        %v1053 = vpop.permute.xlu0 %1052
        %v1054 = vlaneseq
        %v1055 = vshrl.u32 %v1054, 7
        %v1056 = vsub.s32 1, %v1055
        %v1057 = vrot.slane %v1042, %v1056
        %1059 = vbcast.lane.b32.xlu0 %v1057, 256
        %v1060 = vpop.permute.xlu0 %1059
        %v1061 = vlaneseq
        %v1062 = vshrl.u32 %v1061, 7
        %v1063 = vsub.s32 2, %v1062
        %v1064 = vrot.slane %v1042, %v1063
        %1066 = vbcast.lane.b32.xlu0 %v1064, 256
        %v1067 = vpop.permute.xlu0 %1066
        %v1068 = vlaneseq
        %v1069 = vshrl.u32 %v1068, 7
        %v1070 = vsub.s32 3, %v1069
        %v1071 = vrot.slane %v1042, %v1070
        %1073 = vbcast.lane.b32.xlu0 %v1071, 256
        %v1074 = vpop.permute.xlu0 %1073
        %v1075 = vlaneseq
        %v1076 = vshrl.u32 %v1075, 7
        %v1077 = vsub.s32 4, %v1076
        %v1078 = vrot.slane %v1042, %v1077
        %1080 = vbcast.lane.b32.xlu0 %v1078, 256
        %v1081 = vpop.permute.xlu0 %1080
        %v1082 = vlaneseq
        %v1083 = vshrl.u32 %v1082, 7
        %v1084 = vsub.s32 5, %v1083
        %v1085 = vrot.slane %v1042, %v1084
        %1087 = vbcast.lane.b32.xlu0 %v1085, 256
        %v1088 = vpop.permute.xlu0 %1087
        %v1089 = vlaneseq
        %v1090 = vshrl.u32 %v1089, 7
        %v1091 = vsub.s32 6, %v1090
        %v1092 = vrot.slane %v1042, %v1091
        %1094 = vbcast.lane.b32.xlu0 %v1092, 256
        %v1095 = vpop.permute.xlu0 %1094
        %v1096 = vlaneseq
        %v1097 = vshrl.u32 %v1096, 7
        %v1098 = vsub.s32 7, %v1097
        %v1099 = vrot.slane %v1042, %v1098
        %1101 = vbcast.lane.b32.xlu0 %v1099, 256
        %v1102 = vpop.permute.xlu0 %1101
        %v1103 = vlaneseq
        %v1104 = vshrl.u32 %v1103, 7
        %v1105 = vsub.s32 0, %v1104
        %v1106 = vrot.slane %v1044, %v1105
        %1108 = vbcast.lane.b32.xlu0 %v1106, 256
        %v1109 = vpop.permute.xlu0 %1108
        %v1110 = vlaneseq
        %v1111 = vshrl.u32 %v1110, 7
        %v1112 = vsub.s32 1, %v1111
        %v1113 = vrot.slane %v1044, %v1112
        %1115 = vbcast.lane.b32.xlu0 %v1113, 256
        %v1116 = vpop.permute.xlu0 %1115
        %v1117 = vlaneseq
        %v1118 = vshrl.u32 %v1117, 7
        %v1119 = vsub.s32 2, %v1118
        %v1120 = vrot.slane %v1044, %v1119
        %1122 = vbcast.lane.b32.xlu0 %v1120, 256
        %v1123 = vpop.permute.xlu0 %1122
        %v1124 = vlaneseq
        %v1125 = vshrl.u32 %v1124, 7
        %v1126 = vsub.s32 3, %v1125
        %v1127 = vrot.slane %v1044, %v1126
        %1129 = vbcast.lane.b32.xlu0 %v1127, 256
        %v1130 = vpop.permute.xlu0 %1129
        %v1131 = vlaneseq
        %v1132 = vshrl.u32 %v1131, 7
        %v1133 = vsub.s32 4, %v1132
        %v1134 = vrot.slane %v1044, %v1133
        %1136 = vbcast.lane.b32.xlu0 %v1134, 256
        %v1137 = vpop.permute.xlu0 %1136
        %v1138 = vlaneseq
        %v1139 = vshrl.u32 %v1138, 7
        %v1140 = vsub.s32 5, %v1139
        %v1141 = vrot.slane %v1044, %v1140
        %1143 = vbcast.lane.b32.xlu0 %v1141, 256
        %v1144 = vpop.permute.xlu0 %1143
        %v1145 = vlaneseq
        %v1146 = vshrl.u32 %v1145, 7
        %v1147 = vsub.s32 6, %v1146
        %v1148 = vrot.slane %v1044, %v1147
        %1150 = vbcast.lane.b32.xlu0 %v1148, 256
        %v1151 = vpop.permute.xlu0 %1150
        %v1152 = vlaneseq
        %v1153 = vshrl.u32 %v1152, 7
        %v1154 = vsub.s32 7, %v1153
        %v1155 = vrot.slane %v1044, %v1154
        %1157 = vbcast.lane.b32.xlu0 %v1155, 256
        %v1158 = vpop.permute.xlu0 %1157
        %v1175 = vadd.f32 %v993, %v1053
        %v1176 = vadd.f32 %v996, %v1060
        %v1177 = vadd.f32 %v999, %v1067
        %v1178 = vadd.f32 %v1002, %v1074
        %v1179 = vadd.f32 %v1005, %v1081
        %v1180 = vadd.f32 %v1008, %v1088
        %v1181 = vadd.f32 %v1011, %v1095
        %v1182 = vadd.f32 %v1014, %v1102
        %v1183 = vadd.f32 %v1017, %v1109
        %v1184 = vadd.f32 %v1020, %v1116
        %v1185 = vadd.f32 %v1023, %v1123
        %v1186 = vadd.f32 %v1026, %v1130
        %v1187 = vadd.f32 %v1029, %v1137
        %v1188 = vadd.f32 %v1032, %v1144
        %v1189 = vadd.f32 %v1035, %v1151
        %v1190 = vadd.f32 %v1038, %v1158
        %v1191 = vld [vmem:[%s362] sm:$0xff]
        %v1192 = vld [vmem:[%s362 + $0x8] sm:$0xff]
        %v1193 = vlaneseq
        %v1194 = vand.u32 %v1193, 127
        %1195 = vset.pattern.permute.xlu0 0
        %1196 = vperm.xlu0 %1195, %v1191
        %v1197 = vpop.permute.xlu0 %1196
        %1198 = vset.pattern.permute.xlu0 0
        %1199 = vperm.xlu0 %1198, %v1192
        %v1200 = vpop.permute.xlu0 %1199
        %vm1201 = vcmp.lt.s32.totalorder %v1194, %v1197
        %vm1202 = vcmp.lt.s32.totalorder %v1194, %v1200
        %1219 = vset.pattern.permute.xlu0 0
        %1220 = vperm.xlu0 %1219, %v1175
        %v1221 = vpop.permute.xlu0 %1220
        %1222 = vset.pattern.permute.xlu0 0
        %1223 = vperm.xlu0 %1222, %v1176
        %v1224 = vpop.permute.xlu0 %1223
        %1225 = vset.pattern.permute.xlu0 0
        %1226 = vperm.xlu0 %1225, %v1177
        %v1227 = vpop.permute.xlu0 %1226
        %1228 = vset.pattern.permute.xlu0 0
        %1229 = vperm.xlu0 %1228, %v1178
        %v1230 = vpop.permute.xlu0 %1229
        %1231 = vset.pattern.permute.xlu0 0
        %1232 = vperm.xlu0 %1231, %v1179
        %v1233 = vpop.permute.xlu0 %1232
        %1234 = vset.pattern.permute.xlu0 0
        %1235 = vperm.xlu0 %1234, %v1180
        %v1236 = vpop.permute.xlu0 %1235
        %1237 = vset.pattern.permute.xlu0 0
        %1238 = vperm.xlu0 %1237, %v1181
        %v1239 = vpop.permute.xlu0 %1238
        %1240 = vset.pattern.permute.xlu0 0
        %1241 = vperm.xlu0 %1240, %v1182
        %v1242 = vpop.permute.xlu0 %1241
        %1243 = vset.pattern.permute.xlu0 0
        %1244 = vperm.xlu0 %1243, %v1183
        %v1245 = vpop.permute.xlu0 %1244
        %1246 = vset.pattern.permute.xlu0 0
        %1247 = vperm.xlu0 %1246, %v1184
        %v1248 = vpop.permute.xlu0 %1247
        %1249 = vset.pattern.permute.xlu0 0
        %1250 = vperm.xlu0 %1249, %v1185
        %v1251 = vpop.permute.xlu0 %1250
        %1252 = vset.pattern.permute.xlu0 0
        %1253 = vperm.xlu0 %1252, %v1186
        %v1254 = vpop.permute.xlu0 %1253
        %1255 = vset.pattern.permute.xlu0 0
        %1256 = vperm.xlu0 %1255, %v1187
        %v1257 = vpop.permute.xlu0 %1256
        %1258 = vset.pattern.permute.xlu0 0
        %1259 = vperm.xlu0 %1258, %v1188
        %v1260 = vpop.permute.xlu0 %1259
        %1261 = vset.pattern.permute.xlu0 0
        %1262 = vperm.xlu0 %1261, %v1189
        %v1263 = vpop.permute.xlu0 %1262
        %1264 = vset.pattern.permute.xlu0 0
        %1265 = vperm.xlu0 %1264, %v1190
        %v1266 = vpop.permute.xlu0 %1265
        %v1267 = vlaneseq
        %v1268 = vshrl.u32 %v1267, 7
        %v1269 = vsub.s32 %v1194, %v1268
        %v1270 = vrot.slane %v1221, %v1269
        %v1271 = vlaneseq
        %v1272 = vshrl.u32 %v1271, 7
        %v1273 = vsub.s32 %v1194, %v1272
        %v1274 = vrot.slane %v1224, %v1273
        %v1275 = vlaneseq
        %v1276 = vshrl.u32 %v1275, 7
        %v1277 = vsub.s32 %v1194, %v1276
        %v1278 = vrot.slane %v1227, %v1277
        %v1279 = vlaneseq
        %v1280 = vshrl.u32 %v1279, 7
        %v1281 = vsub.s32 %v1194, %v1280
        %v1282 = vrot.slane %v1230, %v1281
        %v1283 = vlaneseq
        %v1284 = vshrl.u32 %v1283, 7
        %v1285 = vsub.s32 %v1194, %v1284
        %v1286 = vrot.slane %v1233, %v1285
        %v1287 = vlaneseq
        %v1288 = vshrl.u32 %v1287, 7
        %v1289 = vsub.s32 %v1194, %v1288
        %v1290 = vrot.slane %v1236, %v1289
        %v1291 = vlaneseq
        %v1292 = vshrl.u32 %v1291, 7
        %v1293 = vsub.s32 %v1194, %v1292
        %v1294 = vrot.slane %v1239, %v1293
        %v1295 = vlaneseq
        %v1296 = vshrl.u32 %v1295, 7
        %v1297 = vsub.s32 %v1194, %v1296
        %v1298 = vrot.slane %v1242, %v1297
        %v1299 = vlaneseq
        %v1300 = vshrl.u32 %v1299, 7
        %v1301 = vsub.s32 %v1194, %v1300
        %v1302 = vrot.slane %v1245, %v1301
        %v1303 = vlaneseq
        %v1304 = vshrl.u32 %v1303, 7
        %v1305 = vsub.s32 %v1194, %v1304
        %v1306 = vrot.slane %v1248, %v1305
        %v1307 = vlaneseq
        %v1308 = vshrl.u32 %v1307, 7
        %v1309 = vsub.s32 %v1194, %v1308
        %v1310 = vrot.slane %v1251, %v1309
        %v1311 = vlaneseq
        %v1312 = vshrl.u32 %v1311, 7
        %v1313 = vsub.s32 %v1194, %v1312
        %v1314 = vrot.slane %v1254, %v1313
        %v1315 = vlaneseq
        %v1316 = vshrl.u32 %v1315, 7
        %v1317 = vsub.s32 %v1194, %v1316
        %v1318 = vrot.slane %v1257, %v1317
        %v1319 = vlaneseq
        %v1320 = vshrl.u32 %v1319, 7
        %v1321 = vsub.s32 %v1194, %v1320
        %v1322 = vrot.slane %v1260, %v1321
        %v1323 = vlaneseq
        %v1324 = vshrl.u32 %v1323, 7
        %v1325 = vsub.s32 %v1194, %v1324
        %v1326 = vrot.slane %v1263, %v1325
        %v1327 = vlaneseq
        %v1328 = vshrl.u32 %v1327, 7
        %v1329 = vsub.s32 %v1194, %v1328
        %v1330 = vrot.slane %v1266, %v1329
        %vm1331 = vcmask 1041409
        %v1332 = vsel %vm1331, %v1274, %v1270
        %vm1333 = vcmask 1042434
        %v1334 = vsel %vm1333, %v1278, %v1332
        %vm1335 = vcmask 1043459
        %v1336 = vsel %vm1335, %v1282, %v1334
        %vm1337 = vcmask 1044484
        %v1338 = vsel %vm1337, %v1286, %v1336
        %vm1339 = vcmask 1045509
        %v1340 = vsel %vm1339, %v1290, %v1338
        %vm1341 = vcmask 1046534
        %v1342 = vsel %vm1341, %v1294, %v1340
        %vm1343 = vcmask 1047559
        %v1344 = vsel %vm1343, %v1298, %v1342
        %v1345 = vsel %vm1331, %v1306, %v1302
        %v1346 = vsel %vm1333, %v1310, %v1345
        %v1347 = vsel %vm1335, %v1314, %v1346
        %v1348 = vsel %vm1337, %v1318, %v1347
        %v1349 = vsel %vm1339, %v1322, %v1348
        %v1350 = vsel %vm1341, %v1326, %v1349
        %v1351 = vsel %vm1343, %v1330, %v1350
        %v1354 = vsel %vm1201, %v1344, -1e+30
        %v1355 = vsel %vm1202, %v1351, -1e+30
        %vm1356 = vcmask 64512
        %v1357 = vsel %vm1356, %v1354, -inf
        %1358 = vmax.xlane.f32.xlu0 %v1357
        %v1359 = vpop.xlane.xlu0 %1358
        %v1360 = vsel %vm1356, %v1355, -inf
        %1361 = vmax.xlane.f32.xlu0 %v1360
        %v1362 = vpop.xlane.xlu0 %1361
        %v1363 = vsub.f32 %v1354, %v1359
        %v1364 = vsub.f32 %v1355, %v1362
        %v1365 = vmul.f32 %v1363, 1.442695
        %v1366 = vpow.pop %v1365
        %v1367 = vmul.f32 %v1364, 1.442695
        %v1368 = vpow.pop %v1367
        %v1369 = vsel %vm1201, %v1366, 0.0
        %v1370 = vsel %vm1202, %v1368, 0.0
        %v1371 = vsel %vm1356, %v1369, 0.0
        %1372 = vadd.xlane.f32.xlu0 %v1371
        %v1373 = vpop.xlane.xlu0 %1372
        %v1374 = vsel %vm1356, %v1370, 0.0
        %1375 = vadd.xlane.f32.xlu0 %v1374
        %v1376 = vpop.xlane.xlu0 %1375
        %v1377 = vrcp.pop %v1373
        %v1378 = vrcp.pop %v1376
        %v1379 = vmul.f32 %v1369, %v1377
        %v1380 = vmul.f32 %v1370, %v1378
        %v1381 = vlaneseq
        %v1382 = vshrl.u32 %v1381, 7
        %v1383 = vsub.s32 0, %v1382
        %v1384 = vrot.slane %v1379, %v1383
        %1386 = vbcast.lane.b32.xlu0 %v1384, 256
        %v1387 = vpop.permute.xlu0 %1386
        %v1388 = vlaneseq
        %v1389 = vshrl.u32 %v1388, 7
        %v1390 = vsub.s32 1, %v1389
        %v1391 = vrot.slane %v1379, %v1390
        %1393 = vbcast.lane.b32.xlu0 %v1391, 256
        %v1394 = vpop.permute.xlu0 %1393
        %v1395 = vlaneseq
        %v1396 = vshrl.u32 %v1395, 7
        %v1397 = vsub.s32 2, %v1396
        %v1398 = vrot.slane %v1379, %v1397
        %1400 = vbcast.lane.b32.xlu0 %v1398, 256
        %v1401 = vpop.permute.xlu0 %1400
        %v1402 = vlaneseq
        %v1403 = vshrl.u32 %v1402, 7
        %v1404 = vsub.s32 3, %v1403
        %v1405 = vrot.slane %v1379, %v1404
        %1407 = vbcast.lane.b32.xlu0 %v1405, 256
        %v1408 = vpop.permute.xlu0 %1407
        %v1409 = vlaneseq
        %v1410 = vshrl.u32 %v1409, 7
        %v1411 = vsub.s32 4, %v1410
        %v1412 = vrot.slane %v1379, %v1411
        %1414 = vbcast.lane.b32.xlu0 %v1412, 256
        %v1415 = vpop.permute.xlu0 %1414
        %v1416 = vlaneseq
        %v1417 = vshrl.u32 %v1416, 7
        %v1418 = vsub.s32 5, %v1417
        %v1419 = vrot.slane %v1379, %v1418
        %1421 = vbcast.lane.b32.xlu0 %v1419, 256
        %v1422 = vpop.permute.xlu0 %1421
        %v1423 = vlaneseq
        %v1424 = vshrl.u32 %v1423, 7
        %v1425 = vsub.s32 6, %v1424
        %v1426 = vrot.slane %v1379, %v1425
        %1428 = vbcast.lane.b32.xlu0 %v1426, 256
        %v1429 = vpop.permute.xlu0 %1428
        %v1430 = vlaneseq
        %v1431 = vshrl.u32 %v1430, 7
        %v1432 = vsub.s32 7, %v1431
        %v1433 = vrot.slane %v1379, %v1432
        %1435 = vbcast.lane.b32.xlu0 %v1433, 256
        %v1436 = vpop.permute.xlu0 %1435
        %v1437 = vlaneseq
        %v1438 = vshrl.u32 %v1437, 7
        %v1439 = vsub.s32 0, %v1438
        %v1440 = vrot.slane %v1380, %v1439
        %1442 = vbcast.lane.b32.xlu0 %v1440, 256
        %v1443 = vpop.permute.xlu0 %1442
        %v1444 = vlaneseq
        %v1445 = vshrl.u32 %v1444, 7
        %v1446 = vsub.s32 1, %v1445
        %v1447 = vrot.slane %v1380, %v1446
        %1449 = vbcast.lane.b32.xlu0 %v1447, 256
        %v1450 = vpop.permute.xlu0 %1449
        %v1451 = vlaneseq
        %v1452 = vshrl.u32 %v1451, 7
        %v1453 = vsub.s32 2, %v1452
        %v1454 = vrot.slane %v1380, %v1453
        %1456 = vbcast.lane.b32.xlu0 %v1454, 256
        %v1457 = vpop.permute.xlu0 %1456
        %v1458 = vlaneseq
        %v1459 = vshrl.u32 %v1458, 7
        %v1460 = vsub.s32 3, %v1459
        %v1461 = vrot.slane %v1380, %v1460
        %1463 = vbcast.lane.b32.xlu0 %v1461, 256
        %v1464 = vpop.permute.xlu0 %1463
        %v1465 = vlaneseq
        %v1466 = vshrl.u32 %v1465, 7
        %v1467 = vsub.s32 4, %v1466
        %v1468 = vrot.slane %v1380, %v1467
        %1470 = vbcast.lane.b32.xlu0 %v1468, 256
        %v1471 = vpop.permute.xlu0 %1470
        %v1472 = vlaneseq
        %v1473 = vshrl.u32 %v1472, 7
        %v1474 = vsub.s32 5, %v1473
        %v1475 = vrot.slane %v1380, %v1474
        %1477 = vbcast.lane.b32.xlu0 %v1475, 256
        %v1478 = vpop.permute.xlu0 %1477
        %v1479 = vlaneseq
        %v1480 = vshrl.u32 %v1479, 7
        %v1481 = vsub.s32 6, %v1480
        %v1482 = vrot.slane %v1380, %v1481
        %1484 = vbcast.lane.b32.xlu0 %v1482, 256
        %v1485 = vpop.permute.xlu0 %1484
        %v1486 = vlaneseq
        %v1487 = vshrl.u32 %v1486, 7
        %v1488 = vsub.s32 7, %v1487
        %v1489 = vrot.slane %v1380, %v1488
        %1491 = vbcast.lane.b32.xlu0 %v1489, 256
        %v1492 = vpop.permute.xlu0 %1491
        %v1493 = vmul.f32 %v1387, %v365
        %v1494 = vmul.f32 %v1394, %v366
        %v1495 = vmul.f32 %v1401, %v367
        %v1496 = vmul.f32 %v1408, %v368
        %v1497 = vmul.f32 %v1415, %v369
        %v1498 = vmul.f32 %v1422, %v370
        %v1499 = vmul.f32 %v1429, %v371
        %v1500 = vmul.f32 %v1436, %v372
        %v1501 = vmul.f32 %v1443, %v373
        %v1502 = vmul.f32 %v1450, %v374
        %v1503 = vmul.f32 %v1457, %v375
        %v1504 = vmul.f32 %v1464, %v376
        %v1505 = vmul.f32 %v1471, %v377
        %v1506 = vmul.f32 %v1478, %v378
        %v1507 = vmul.f32 %v1485, %v379
        %v1508 = vmul.f32 %v1492, %v380
        %v1509 = vsel %vm385, %v1493, 0.0
        %v1510 = vrot.slane %v1509, 4
        %v1511 = vadd.f32 %v1509, %v1510
        %v1512 = vrot.slane %v1511, 2
        %v1513 = vadd.f32 %v1511, %v1512
        %v1514 = vrot.slane %v1513, 1
        %v1515 = vadd.f32 %v1513, %v1514
        %v1516 = vsel %vm385, %v1494, 0.0
        %v1517 = vrot.slane %v1516, 4
        %v1518 = vadd.f32 %v1516, %v1517
        %v1519 = vrot.slane %v1518, 2
        %v1520 = vadd.f32 %v1518, %v1519
        %v1521 = vrot.slane %v1520, 1
        %v1522 = vadd.f32 %v1520, %v1521
        %v1523 = vsel %vm385, %v1495, 0.0
        %v1524 = vrot.slane %v1523, 4
        %v1525 = vadd.f32 %v1523, %v1524
        %v1526 = vrot.slane %v1525, 2
        %v1527 = vadd.f32 %v1525, %v1526
        %v1528 = vrot.slane %v1527, 1
        %v1529 = vadd.f32 %v1527, %v1528
        %v1530 = vsel %vm385, %v1496, 0.0
        %v1531 = vrot.slane %v1530, 4
        %v1532 = vadd.f32 %v1530, %v1531
        %v1533 = vrot.slane %v1532, 2
        %v1534 = vadd.f32 %v1532, %v1533
        %v1535 = vrot.slane %v1534, 1
        %v1536 = vadd.f32 %v1534, %v1535
        %v1537 = vsel %vm385, %v1497, 0.0
        %v1538 = vrot.slane %v1537, 4
        %v1539 = vadd.f32 %v1537, %v1538
        %v1540 = vrot.slane %v1539, 2
        %v1541 = vadd.f32 %v1539, %v1540
        %v1542 = vrot.slane %v1541, 1
        %v1543 = vadd.f32 %v1541, %v1542
        %v1544 = vsel %vm385, %v1498, 0.0
        %v1545 = vrot.slane %v1544, 4
        %v1546 = vadd.f32 %v1544, %v1545
        %v1547 = vrot.slane %v1546, 2
        %v1548 = vadd.f32 %v1546, %v1547
        %v1549 = vrot.slane %v1548, 1
        %v1550 = vadd.f32 %v1548, %v1549
        %v1551 = vsel %vm385, %v1499, 0.0
        %v1552 = vrot.slane %v1551, 4
        %v1553 = vadd.f32 %v1551, %v1552
        %v1554 = vrot.slane %v1553, 2
        %v1555 = vadd.f32 %v1553, %v1554
        %v1556 = vrot.slane %v1555, 1
        %v1557 = vadd.f32 %v1555, %v1556
        %v1558 = vsel %vm385, %v1500, 0.0
        %v1559 = vrot.slane %v1558, 4
        %v1560 = vadd.f32 %v1558, %v1559
        %v1561 = vrot.slane %v1560, 2
        %v1562 = vadd.f32 %v1560, %v1561
        %v1563 = vrot.slane %v1562, 1
        %v1564 = vadd.f32 %v1562, %v1563
        %v1565 = vsel %vm385, %v1501, 0.0
        %v1566 = vrot.slane %v1565, 4
        %v1567 = vadd.f32 %v1565, %v1566
        %v1568 = vrot.slane %v1567, 2
        %v1569 = vadd.f32 %v1567, %v1568
        %v1570 = vrot.slane %v1569, 1
        %v1571 = vadd.f32 %v1569, %v1570
        %v1572 = vsel %vm385, %v1502, 0.0
        %v1573 = vrot.slane %v1572, 4
        %v1574 = vadd.f32 %v1572, %v1573
        %v1575 = vrot.slane %v1574, 2
        %v1576 = vadd.f32 %v1574, %v1575
        %v1577 = vrot.slane %v1576, 1
        %v1578 = vadd.f32 %v1576, %v1577
        %v1579 = vsel %vm385, %v1503, 0.0
        %v1580 = vrot.slane %v1579, 4
        %v1581 = vadd.f32 %v1579, %v1580
        %v1582 = vrot.slane %v1581, 2
        %v1583 = vadd.f32 %v1581, %v1582
        %v1584 = vrot.slane %v1583, 1
        %v1585 = vadd.f32 %v1583, %v1584
        %v1586 = vsel %vm385, %v1504, 0.0
        %v1587 = vrot.slane %v1586, 4
        %v1588 = vadd.f32 %v1586, %v1587
        %v1589 = vrot.slane %v1588, 2
        %v1590 = vadd.f32 %v1588, %v1589
        %v1591 = vrot.slane %v1590, 1
        %v1592 = vadd.f32 %v1590, %v1591
        %v1593 = vsel %vm385, %v1505, 0.0
        %v1594 = vrot.slane %v1593, 4
        %v1595 = vadd.f32 %v1593, %v1594
        %v1596 = vrot.slane %v1595, 2
        %v1597 = vadd.f32 %v1595, %v1596
        %v1598 = vrot.slane %v1597, 1
        %v1599 = vadd.f32 %v1597, %v1598
        %v1600 = vsel %vm385, %v1506, 0.0
        %v1601 = vrot.slane %v1600, 4
        %v1602 = vadd.f32 %v1600, %v1601
        %v1603 = vrot.slane %v1602, 2
        %v1604 = vadd.f32 %v1602, %v1603
        %v1605 = vrot.slane %v1604, 1
        %v1606 = vadd.f32 %v1604, %v1605
        %v1607 = vsel %vm385, %v1507, 0.0
        %v1608 = vrot.slane %v1607, 4
        %v1609 = vadd.f32 %v1607, %v1608
        %v1610 = vrot.slane %v1609, 2
        %v1611 = vadd.f32 %v1609, %v1610
        %v1612 = vrot.slane %v1611, 1
        %v1613 = vadd.f32 %v1611, %v1612
        %v1614 = vsel %vm385, %v1508, 0.0
        %v1615 = vrot.slane %v1614, 4
        %v1616 = vadd.f32 %v1614, %v1615
        %v1617 = vrot.slane %v1616, 2
        %v1618 = vadd.f32 %v1616, %v1617
        %v1619 = vrot.slane %v1618, 1
        %v1620 = vadd.f32 %v1618, %v1619
        %v1637 = vsel %vm1331, %v1522, %v1515
        %v1638 = vsel %vm1333, %v1529, %v1637
        %v1639 = vsel %vm1335, %v1536, %v1638
        %v1640 = vsel %vm1337, %v1543, %v1639
        %v1641 = vsel %vm1339, %v1550, %v1640
        %v1642 = vsel %vm1341, %v1557, %v1641
        %v1643 = vsel %vm1343, %v1564, %v1642
        %v1644 = vsel %vm1331, %v1578, %v1571
        %v1645 = vsel %vm1333, %v1585, %v1644
        %v1646 = vsel %vm1335, %v1592, %v1645
        %v1647 = vsel %vm1337, %v1599, %v1646
        %v1648 = vsel %vm1339, %v1606, %v1647
        %v1649 = vsel %vm1341, %v1613, %v1648
        %v1650 = vsel %vm1343, %v1620, %v1649
        %1653 = vst.msk [vmem:[%s344] sm:$0xff] %vm385, %v1643
        %1654 = vst.msk [vmem:[%s344 + $0x8] sm:$0xff] %vm385, %v1650
        %s1655 = sand.u32 %s199, 1
        %s1656 = scalar_lea.sflag [#allocation4], %s1655
        %s1657 = sand.u32 %s199, 1
        %s1658 = smul.addr %s1657, 16
        %s1659 = scalar_lea.vmem [#allocation5], %s1658
        // Predicated region
        $region53: #{tpu_custom_call.1} parent=47 // pred_check
          %p1660 = pneg %p209
        $region54: #{tpu_custom_call.1} parent=47 // pred_check_branch
          %1662 = sbr.rel (%p1660) target = $region56
        $region55: #{tpu_custom_call.1} parent=47 // pred_region
          %s1663 = smul.u32 2, %s24
          %s1665 = ssub.s32 256, 256
          %1666 = vsyncadd %s1656, %s1665
          %s1667 = smul.addr %s1663, 128
          %s1668 = scalar_lea.hbm %s7, %s1667
          %s1669 = sshll.u32 %s1659, 4
          %s1670 = int_to_ptr.vmem [resolvable:$true] %s1669
          %1675 = dma.vmem_to_hbm [thread:$0]  %s1670, 256, %s1668, %s1656, 128, 128, 8
        $region56: #{tpu_custom_call.1} parent=47 // pred_fallthru
          _
      $region48: #{tpu_custom_call.1} parent=5 // pred_fallthru
        _
      %p1676 = scmp.le.s32.totalorder 2, %s19
      // Predicated region
      $region57: #{tpu_custom_call.1} parent=5 // pred_check
        %p1677 = pneg %p1676
      $region58: #{tpu_custom_call.1} parent=5 // pred_check_branch
        %1679 = sbr.rel (%p1677) target = $region60
      $region59: #{tpu_custom_call.1} parent=5 // pred_region
        %s1680 = ssub.s32 %s19, 2
        // Predicated region
        $region61: #{tpu_custom_call.1} parent=59 // pred_check
          %p1681 = pneg %p215
        $region62: #{tpu_custom_call.1} parent=59 // pred_check_branch
          %1683 = sbr.rel (%p1681) target = $region64
        $region63: #{tpu_custom_call.1} parent=59 // pred_region
          %s1684 = sand.u32 %s200, 1
          %s1685 = scalar_lea.sflag [#allocation4], %s1684
          %s1686 = sand.u32 %s200, 1
          %s1687 = smul.addr %s1686, 16
          %s1688 = scalar_lea.vmem [#allocation5], %s1687
          %1689 = dma.done %s1685, 256
        $region64: #{tpu_custom_call.1} parent=59 // pred_fallthru
          _
      $region60: #{tpu_custom_call.1} parent=5 // pred_fallthru
        _
    $region6: #{tpu_custom_call.1} parent=1 // loop_footer
      %s23 = sadd.s32 1, %s19
    $region7: #{tpu_custom_call.1} parent=1 // loop_footer_branch
      %18 = sbr.rel target = $region3
    $region8: #{tpu_custom_call.1} parent=1 // loop_exit
      _
    %1690 = vsyncpa [#allocation3], 1
    %s1691 = scalar_lea.sflag [#allocation3], 1
    %1692 = vsyncpa %s1691, 1
    %1693 = vsyncpa [#allocation4], 1
    %s1694 = scalar_lea.sflag [#allocation4], 1
    %1695 = vsyncpa %s1694, 1

</llo_original>
